<compile_context>
chip_gen: v5e
topology: v5e:2x2
jax: 0.10.0
libtpu: 0.0.40
codegen_flags: <defaults>
</compile_context>

<pallas_src>
import jax
import jax.numpy as jnp
import numpy as np
from jax.experimental import pallas as pl
from jax.experimental.pallas import tpu as pltpu

BN_EPS = 1e-5


# -----------------------------------------------------------------------------------
# Kernel 1: 3x3 SAME conv (9 shifted MXU matmuls, bias-free) + per-channel sum / sumsq
# -----------------------------------------------------------------------------------
def _make_conv_stats_kernel(cout, lco, wpad):
    """cout: output channels; lco: output columns per image = H*(W+2)-2; wpad = W+2."""

    def kernel(x_ref, w_ref, m_ref, y_ref, ssum_ref, ssq_ref):
        step = pl.program_id(0)

        # stats accumulators are resident across the whole (arbitrary) batch grid axis
        @pl.when(step == 0)
        def _init():
            ssum_ref[...] = jnp.zeros_like(ssum_ref)
            ssq_ref[...] = jnp.zeros_like(ssq_ref)

        x = x_ref[...]                                    # (Cin, (H+2)*(W+2))
        acc = jnp.zeros((cout, lco), jnp.float32)
        for dy in range(3):
            for dx in range(3):
                off = dy * wpad + dx                      # static lane offset of this tap
                xt = x[:, off:off + lco]                  # (Cin, lco) shifted window
                acc = acc + jnp.dot(w_ref[dy * 3 + dx], xt,
                                    preferred_element_type=jnp.float32)

        y_ref[...] = acc                                  # pre-BN conv output (lane-dense)
        ym = acc * m_ref[...]                             # zero out the padding columns
        ssum_ref[...] += jnp.sum(ym, axis=1, keepdims=True)
        ssq_ref[...] += jnp.sum(ym * ym, axis=1, keepdims=True)

    return kernel


def conv3x3_with_stats(x_flat, w_taps, mask, H, W):
    """x_flat: (N, Cin, (H+2)*(W+2)) zero-padded, flattened NCHW image.
       w_taps: (9, Cout, Cin) with tap index dy*3+dx.
       mask:   (1, lco) 1.0 on valid output columns, 0.0 on padding columns.
       Returns (y_pre (N, Cout, lco), sum (Cout, 1), sumsq (Cout, 1))."""
    N, cin, lb = x_flat.shape
    cout = w_taps.shape[1]
    wpad = W + 2
    lco = H * wpad - 2          # covers every valid output position; all tap slices stay in-bounds

    # Per-step VMEM: ~2x double-buffered (Cin+Cout) * (H+2)*(W+2) * 4B + weights — a few KiB
    # here, far under the 16/32 MiB scoped defaults on v5e/v6e/v7x.
    # TODO(synk): for very large H*W add an H-tile grid axis (halo rows via manual DMA) so the
    # per-step block stays under v7x's 64 MiB physical / 32 MiB scoped VMEM.
    kernel = _make_conv_stats_kernel(cout, lco, wpad)
    flops = 2 * N * lco * cout * 9 * cin
    bytes_accessed = 4 * (N * cin * lb + 9 * cout * cin + lco + N * cout * lco + 2 * cout)

    return pl.pallas_call(
        kernel,
        grid=(N,),
        in_specs=[
            pl.BlockSpec((None, cin, lb), lambda n: (n, 0, 0)),   # one image per grid step
            pl.BlockSpec((9, cout, cin), lambda n: (0, 0, 0)),    # weights pinned in VMEM
            pl.BlockSpec((1, lco), lambda n: (0, 0)),             # valid-column mask pinned
        ],
        out_specs=(
            pl.BlockSpec((None, cout, lco), lambda n: (n, 0, 0)),
            pl.BlockSpec((cout, 1), lambda n: (0, 0)),            # resident sum accumulator
            pl.BlockSpec((cout, 1), lambda n: (0, 0)),            # resident sumsq accumulator
        ),
        out_shape=(
            jax.ShapeDtypeStruct((N, cout, lco), jnp.float32),
            jax.ShapeDtypeStruct((cout, 1), jnp.float32),
            jax.ShapeDtypeStruct((cout, 1), jnp.float32),
        ),
        # BN stats accumulate across the batch grid axis -> must be "arbitrary".
        compiler_params=pltpu.CompilerParams(dimension_semantics=("arbitrary",)),
        cost_estimate=pl.CostEstimate(flops=flops, transcendentals=0,
                                      bytes_accessed=bytes_accessed),
    )(x_flat, w_taps, mask)


# -----------------------------------------------------------------------------------
# Kernel 2: per-channel scale/shift (folded BatchNorm) + ReLU, fully parallel over batch
# -----------------------------------------------------------------------------------
def _bn_relu_kernel(y_ref, scale_ref, shift_ref, o_ref):
    o_ref[...] = jnp.maximum(y_ref[...] * scale_ref[...] + shift_ref[...], 0.0)


def bn_relu(y_pre, scale, shift):
    N, cout, lco = y_pre.shape
    return pl.pallas_call(
        _bn_relu_kernel,
        grid=(N,),
        in_specs=[
            pl.BlockSpec((None, cout, lco), lambda n: (n, 0, 0)),
            pl.BlockSpec((cout, 1), lambda n: (0, 0)),
            pl.BlockSpec((cout, 1), lambda n: (0, 0)),
        ],
        out_specs=pl.BlockSpec((None, cout, lco), lambda n: (n, 0, 0)),
        out_shape=jax.ShapeDtypeStruct((N, cout, lco), jnp.float32),
        # independent per image -> shard across the 2 TensorCores on v7x, harmless elsewhere
        compiler_params=pltpu.CompilerParams(dimension_semantics=("parallel",)),
    )(y_pre, scale, shift)


# -----------------------------------------------------------------------------------
# JAX-side glue: layout plumbing + O(Cout) BN finalization
# -----------------------------------------------------------------------------------
def _bn_scale_shift(ssum, ssq, gamma, beta, count):
    mean = ssum / count
    var = ssq / count - mean * mean       # biased variance, as in BatchNorm2d training
    inv = jax.lax.rsqrt(var + BN_EPS)
    scale = gamma * inv
    shift = beta - mean * scale
    return scale, shift


def _pad_flatten(x_nchw):
    """(N, C, H, W) -> zero-padded flattened (N, C, (H+2)*(W+2))."""
    N, C, H, W = x_nchw.shape
    return jnp.pad(x_nchw, ((0, 0), (0, 0), (1, 1), (1, 1))).reshape(N, C, (H + 2) * (W + 2))


def _unflatten_valid(y_flat, H, W):
    """(N, C, H*(W+2)-2) conv-domain columns -> (N, C, H, W) NCHW (drops padding columns)."""
    N, C, _ = y_flat.shape
    wpad = W + 2
    return jnp.pad(y_flat, ((0, 0), (0, 0), (0, 2))).reshape(N, C, H, wpad)[..., :W]


def en_conv_block_forward(x_nchw, params):
    N, cin, H, W = x_nchw.shape
    wpad = W + 2
    lco = H * wpad - 2
    count = float(N * H * W)

    x_flat = _pad_flatten(x_nchw)
    cols = jnp.arange(lco, dtype=jnp.int32)
    mask = ((cols % wpad) < W).astype(jnp.float32).reshape(1, lco)

    # stage 1: conv (+ global BN stats) -> finalize scale/shift -> normalize + ReLU
    y1, s1, q1 = conv3x3_with_stats(x_flat, params["w1"], mask, H, W)
    sc1, sh1 = _bn_scale_shift(s1, q1, params["g1"], params["beta1"], count)
    a1 = bn_relu(y1, sc1, sh1)                                    # (N, Cout, lco)

    # TODO(synk): fuse this re-pad (pure layout) into the bn_relu kernel via an offset store
    # once unaligned minor-dim stores are verified on the target toolchain.
    x2_flat = _pad_flatten(_unflatten_valid(a1, H, W))

    # stage 2
    y2, s2, q2 = conv3x3_with_stats(x2_flat, params["w2"], mask, H, W)
    sc2, sh2 = _bn_scale_shift(s2, q2, params["g2"], params["beta2"], count)
    a2 = bn_relu(y2, sc2, sh2)                                    # (N, Cout, lco)

    return _unflatten_valid(a2, H, W)                             # already NCHW


# -----------------------------------------------------------------------------------
# Parameters + pure-JAX reference (mirrors the PyTorch training-mode forward)
# -----------------------------------------------------------------------------------
def init_params(key, cin):
    cout = 32 if cin == 3 else cin * 2
    k1, k2, k3, k4 = jax.random.split(key, 4)
    # HWIO weights; biases are only used by the reference (they cancel inside train-mode BN).
    w1_hwio = jax.random.normal(k1, (3, 3, cin, cout), jnp.float32) * 0.1
    b1 = jax.random.normal(k2, (cout,), jnp.float32) * 0.1
    w2_hwio = jax.random.normal(k3, (3, 3, cout, cout), jnp.float32) * 0.1
    b2 = jax.random.normal(k4, (cout,), jnp.float32) * 0.1
    g1 = jnp.ones((cout, 1), jnp.float32)
    beta1 = jnp.zeros((cout, 1), jnp.float32)
    g2 = jnp.ones((cout, 1), jnp.float32)
    beta2 = jnp.zeros((cout, 1), jnp.float32)
    # kernel-side weights: (9, Cout, Cin), tap index dy*3+dx
    w1_taps = jnp.transpose(w1_hwio, (0, 1, 3, 2)).reshape(9, cout, cin)
    w2_taps = jnp.transpose(w2_hwio, (0, 1, 3, 2)).reshape(9, cout, cout)
    params = dict(w1=w1_taps, w2=w2_taps, g1=g1, beta1=beta1, g2=g2, beta2=beta2)
    raw = dict(w1=w1_hwio, b1=b1, w2=w2_hwio, b2=b2,
               g1=g1, beta1=beta1, g2=g2, beta2=beta2)
    return params, raw


def reference_forward(x_nchw, raw):
    """Pure-JAX reference mirroring the PyTorch training-mode forward (with conv bias)."""
    def conv(x, w, b):
        y = jax.lax.conv_general_dilated(
            x, w, window_strides=(1, 1), padding="SAME",
            dimension_numbers=("NHWC", "HWIO", "NHWC"))
        return y + b.reshape(1, 1, 1, -1)

    def bn_relu_ref(y, g, be):
        mean = jnp.mean(y, axis=(0, 1, 2), keepdims=True)
        var = jnp.mean((y - mean) ** 2, axis=(0, 1, 2), keepdims=True)
        out = (y - mean) * jax.lax.rsqrt(var + BN_EPS) * g.reshape(1, 1, 1, -1) \
              + be.reshape(1, 1, 1, -1)
        return jnp.maximum(out, 0.0)

    x = jnp.transpose(x_nchw, (0, 2, 3, 1))
    y = bn_relu_ref(conv(x, raw["w1"], raw["b1"]), raw["g1"], raw["beta1"])
    y = bn_relu_ref(conv(y, raw["w2"], raw["b2"]), raw["g2"], raw["beta2"])
    return jnp.transpose(y, (0, 3, 1, 2))


if __name__ == "__main__":
    key = jax.random.PRNGKey(0)
    kx, kp = jax.random.split(key)

    N, CIN, H, W = 2, 4, 16, 16   # input != 3  ->  out_channels = 2 * CIN = 8
    x = jax.random.normal(kx, (N, CIN, H, W), jnp.float32)
    params, raw = init_params(kp, CIN)

    fwd = jax.jit(en_conv_block_forward)
    out = jax.block_until_ready(fwd(x, params))
    assert out.shape == (N, 2 * CIN, H, W), out.shape

    ref = jax.block_until_ready(reference_forward(x, raw))
    np.testing.assert_allclose(np.asarray(out), np.asarray(ref), rtol=2e-4, atol=2e-4)

    print("KERNEL_OK")
</pallas_src>

<mosaic_0001>
module attributes {stable_mosaic.version = 11 : i64} {
  func.func @kernel(%arg0: i32, %arg1: memref<1x4x324xf32, #tpu.memory_space<vmem>>, %arg2: memref<9x8x4xf32, #tpu.memory_space<vmem>>, %arg3: memref<1x286xf32, #tpu.memory_space<vmem>>, %arg4: memref<1x8x286xf32, #tpu.memory_space<vmem>>, %arg5: memref<8x1xf32, #tpu.memory_space<vmem>>, %arg6: memref<8x1xf32, #tpu.memory_space<vmem>>) attributes {dimension_semantics = [#tpu.dimension_semantics<arbitrary>], iteration_bounds = array<i64: 2>, scalar_prefetch = 0 : i64, scratch_operands = 0 : i64, tpu.core_type = #tpu.core_type<tc>, window_params = [{transform_indices = @transform_0, window_bounds = array<i64: 1, 4, 324>}, {pipeline_mode = #tpu.pipeline_mode<synchronous>, transform_indices = @transform_1, window_bounds = array<i64: 9, 8, 4>}, {pipeline_mode = #tpu.pipeline_mode<synchronous>, transform_indices = @transform_2, window_bounds = array<i64: 1, 286>}, {transform_indices = @transform_3, window_bounds = array<i64: 1, 8, 286>}, {pipeline_mode = #tpu.pipeline_mode<synchronous>, transform_indices = @transform_4, window_bounds = array<i64: 8, 1>}, {pipeline_mode = #tpu.pipeline_mode<synchronous>, transform_indices = @transform_5, window_bounds = array<i64: 8, 1>}]} {
    %c0_i32 = arith.constant 0 : i32
    %0 = arith.cmpi eq, %arg0, %c0_i32 : i32
    %1 = arith.extui %0 : i1 to i32
    %c0_i32_0 = arith.constant 0 : i32
    %2 = arith.cmpi ne, %1, %c0_i32_0 : i32
    scf.if %2 {
      %cst_46 = arith.constant 0.000000e+00 : f32
      %68 = vector.broadcast %cst_46 : f32 to vector<8x1xf32>
      %c0_47 = arith.constant 0 : index
      %c0_48 = arith.constant 0 : index
      %69 = vector.load %arg5[%c0_47, %c0_48] : memref<8x1xf32, #tpu.memory_space<vmem>>, vector<8x1xf32>
      tpu.vector_store %arg5[%c0_47, %c0_48], %68 {strides = array<i32>} : memref<8x1xf32, #tpu.memory_space<vmem>>, vector<8x1xf32>,
      %cst_49 = arith.constant 0.000000e+00 : f32
      %70 = vector.broadcast %cst_49 : f32 to vector<8x1xf32>
      %c0_50 = arith.constant 0 : index
      %c0_51 = arith.constant 0 : index
      %71 = vector.load %arg6[%c0_50, %c0_51] : memref<8x1xf32, #tpu.memory_space<vmem>>, vector<8x1xf32>
      tpu.vector_store %arg6[%c0_50, %c0_51], %70 {strides = array<i32>} : memref<8x1xf32, #tpu.memory_space<vmem>>, vector<8x1xf32>,
    } else {
    }
    %c0 = arith.constant 0 : index
    %c0_1 = arith.constant 0 : index
    %c0_2 = arith.constant 0 : index
    %3 = vector.load %arg1[%c0, %c0_1, %c0_2] : memref<1x4x324xf32, #tpu.memory_space<vmem>>, vector<1x4x324xf32>
    %4 = vector.shape_cast %3 : vector<1x4x324xf32> to vector<4x324xf32>
    %cst = arith.constant 0.000000e+00 : f32
    %5 = vector.broadcast %cst : f32 to vector<8x286xf32>
    %6 = vector.extract_strided_slice %4 {offsets = [0, 0], sizes = [4, 286], strides = [1, 1]} : vector<4x324xf32> to vector<4x286xf32>
    %c0_3 = arith.constant 0 : index
    %c0_4 = arith.constant 0 : index
    %c0_5 = arith.constant 0 : index
    %7 = vector.load %arg2[%c0_3, %c0_4, %c0_5] : memref<9x8x4xf32, #tpu.memory_space<vmem>>, vector<1x8x4xf32>
    %8 = vector.shape_cast %7 : vector<1x8x4xf32> to vector<8x4xf32>
    %cst_6 = arith.constant dense<0.000000e+00> : vector<8x286xf32>
    %9 = tpu.matmul %8, %6, %cst_6 {dimension_numbers = #tpu.dot_dimension_numbers<[1], [0], [0], [1], [0, 0, 1, 1], [], []>} : vector<8x4xf32>, vector<4x286xf32>, vector<8x286xf32> -> vector<8x286xf32>
    %10 = arith.addf %5, %9 : vector<8x286xf32>
    %11 = vector.extract_strided_slice %4 {offsets = [0, 1], sizes = [4, 286], strides = [1, 1]} : vector<4x324xf32> to vector<4x286xf32>
    %c1 = arith.constant 1 : index
    %c0_7 = arith.constant 0 : index
    %c0_8 = arith.constant 0 : index
    %12 = vector.load %arg2[%c1, %c0_7, %c0_8] : memref<9x8x4xf32, #tpu.memory_space<vmem>>, vector<1x8x4xf32>
    %13 = vector.shape_cast %12 : vector<1x8x4xf32> to vector<8x4xf32>
    %cst_9 = arith.constant dense<0.000000e+00> : vector<8x286xf32>
    %14 = tpu.matmul %13, %11, %cst_9 {dimension_numbers = #tpu.dot_dimension_numbers<[1], [0], [0], [1], [0, 0, 1, 1], [], []>} : vector<8x4xf32>, vector<4x286xf32>, vector<8x286xf32> -> vector<8x286xf32>
    %15 = arith.addf %10, %14 : vector<8x286xf32>
    %16 = vector.extract_strided_slice %4 {offsets = [0, 2], sizes = [4, 286], strides = [1, 1]} : vector<4x324xf32> to vector<4x286xf32>
    %c2 = arith.constant 2 : index
    %c0_10 = arith.constant 0 : index
    %c0_11 = arith.constant 0 : index
    %17 = vector.load %arg2[%c2, %c0_10, %c0_11] : memref<9x8x4xf32, #tpu.memory_space<vmem>>, vector<1x8x4xf32>
    %18 = vector.shape_cast %17 : vector<1x8x4xf32> to vector<8x4xf32>
    %cst_12 = arith.constant dense<0.000000e+00> : vector<8x286xf32>
    %19 = tpu.matmul %18, %16, %cst_12 {dimension_numbers = #tpu.dot_dimension_numbers<[1], [0], [0], [1], [0, 0, 1, 1], [], []>} : vector<8x4xf32>, vector<4x286xf32>, vector<8x286xf32> -> vector<8x286xf32>
    %20 = arith.addf %15, %19 : vector<8x286xf32>
    %21 = vector.extract_strided_slice %4 {offsets = [0, 18], sizes = [4, 286], strides = [1, 1]} : vector<4x324xf32> to vector<4x286xf32>
    %c3 = arith.constant 3 : index
    %c0_13 = arith.constant 0 : index
    %c0_14 = arith.constant 0 : index
    %22 = vector.load %arg2[%c3, %c0_13, %c0_14] : memref<9x8x4xf32, #tpu.memory_space<vmem>>, vector<1x8x4xf32>
    %23 = vector.shape_cast %22 : vector<1x8x4xf32> to vector<8x4xf32>
    %cst_15 = arith.constant dense<0.000000e+00> : vector<8x286xf32>
    %24 = tpu.matmul %23, %21, %cst_15 {dimension_numbers = #tpu.dot_dimension_numbers<[1], [0], [0], [1], [0, 0, 1, 1], [], []>} : vector<8x4xf32>, vector<4x286xf32>, vector<8x286xf32> -> vector<8x286xf32>
    %25 = arith.addf %20, %24 : vector<8x286xf32>
    %26 = vector.extract_strided_slice %4 {offsets = [0, 19], sizes = [4, 286], strides = [1, 1]} : vector<4x324xf32> to vector<4x286xf32>
    %c4 = arith.constant 4 : index
    %c0_16 = arith.constant 0 : index
    %c0_17 = arith.constant 0 : index
    %27 = vector.load %arg2[%c4, %c0_16, %c0_17] : memref<9x8x4xf32, #tpu.memory_space<vmem>>, vector<1x8x4xf32>
    %28 = vector.shape_cast %27 : vector<1x8x4xf32> to vector<8x4xf32>
    %cst_18 = arith.constant dense<0.000000e+00> : vector<8x286xf32>
    %29 = tpu.matmul %28, %26, %cst_18 {dimension_numbers = #tpu.dot_dimension_numbers<[1], [0], [0], [1], [0, 0, 1, 1], [], []>} : vector<8x4xf32>, vector<4x286xf32>, vector<8x286xf32> -> vector<8x286xf32>
    %30 = arith.addf %25, %29 : vector<8x286xf32>
    %31 = vector.extract_strided_slice %4 {offsets = [0, 20], sizes = [4, 286], strides = [1, 1]} : vector<4x324xf32> to vector<4x286xf32>
    %c5 = arith.constant 5 : index
    %c0_19 = arith.constant 0 : index
    %c0_20 = arith.constant 0 : index
    %32 = vector.load %arg2[%c5, %c0_19, %c0_20] : memref<9x8x4xf32, #tpu.memory_space<vmem>>, vector<1x8x4xf32>
    %33 = vector.shape_cast %32 : vector<1x8x4xf32> to vector<8x4xf32>
    %cst_21 = arith.constant dense<0.000000e+00> : vector<8x286xf32>
    %34 = tpu.matmul %33, %31, %cst_21 {dimension_numbers = #tpu.dot_dimension_numbers<[1], [0], [0], [1], [0, 0, 1, 1], [], []>} : vector<8x4xf32>, vector<4x286xf32>, vector<8x286xf32> -> vector<8x286xf32>
    %35 = arith.addf %30, %34 : vector<8x286xf32>
    %36 = vector.extract_strided_slice %4 {offsets = [0, 36], sizes = [4, 286], strides = [1, 1]} : vector<4x324xf32> to vector<4x286xf32>
    %c6 = arith.constant 6 : index
    %c0_22 = arith.constant 0 : index
    %c0_23 = arith.constant 0 : index
    %37 = vector.load %arg2[%c6, %c0_22, %c0_23] : memref<9x8x4xf32, #tpu.memory_space<vmem>>, vector<1x8x4xf32>
    %38 = vector.shape_cast %37 : vector<1x8x4xf32> to vector<8x4xf32>
    %cst_24 = arith.constant dense<0.000000e+00> : vector<8x286xf32>
    %39 = tpu.matmul %38, %36, %cst_24 {dimension_numbers = #tpu.dot_dimension_numbers<[1], [0], [0], [1], [0, 0, 1, 1], [], []>} : vector<8x4xf32>, vector<4x286xf32>, vector<8x286xf32> -> vector<8x286xf32>
    %40 = arith.addf %35, %39 : vector<8x286xf32>
    %41 = vector.extract_strided_slice %4 {offsets = [0, 37], sizes = [4, 286], strides = [1, 1]} : vector<4x324xf32> to vector<4x286xf32>
    %c7 = arith.constant 7 : index
    %c0_25 = arith.constant 0 : index
    %c0_26 = arith.constant 0 : index
    %42 = vector.load %arg2[%c7, %c0_25, %c0_26] : memref<9x8x4xf32, #tpu.memory_space<vmem>>, vector<1x8x4xf32>
    %43 = vector.shape_cast %42 : vector<1x8x4xf32> to vector<8x4xf32>
    %cst_27 = arith.constant dense<0.000000e+00> : vector<8x286xf32>
    %44 = tpu.matmul %43, %41, %cst_27 {dimension_numbers = #tpu.dot_dimension_numbers<[1], [0], [0], [1], [0, 0, 1, 1], [], []>} : vector<8x4xf32>, vector<4x286xf32>, vector<8x286xf32> -> vector<8x286xf32>
    %45 = arith.addf %40, %44 : vector<8x286xf32>
    %46 = vector.extract_strided_slice %4 {offsets = [0, 38], sizes = [4, 286], strides = [1, 1]} : vector<4x324xf32> to vector<4x286xf32>
    %c8 = arith.constant 8 : index
    %c0_28 = arith.constant 0 : index
    %c0_29 = arith.constant 0 : index
    %47 = vector.load %arg2[%c8, %c0_28, %c0_29] : memref<9x8x4xf32, #tpu.memory_space<vmem>>, vector<1x8x4xf32>
    %48 = vector.shape_cast %47 : vector<1x8x4xf32> to vector<8x4xf32>
    %cst_30 = arith.constant dense<0.000000e+00> : vector<8x286xf32>
    %49 = tpu.matmul %48, %46, %cst_30 {dimension_numbers = #tpu.dot_dimension_numbers<[1], [0], [0], [1], [0, 0, 1, 1], [], []>} : vector<8x4xf32>, vector<4x286xf32>, vector<8x286xf32> -> vector<8x286xf32>
    %50 = arith.addf %45, %49 : vector<8x286xf32>
    %c0_31 = arith.constant 0 : index
    %c0_32 = arith.constant 0 : index
    %c0_33 = arith.constant 0 : index
    %51 = vector.load %arg4[%c0_31, %c0_32, %c0_33] : memref<1x8x286xf32, #tpu.memory_space<vmem>>, vector<1x8x286xf32>
    %52 = vector.shape_cast %51 : vector<1x8x286xf32> to vector<8x286xf32>
    %53 = vector.shape_cast %50 : vector<8x286xf32> to vector<1x8x286xf32>
    tpu.vector_store %arg4[%c0_31, %c0_32, %c0_33], %53 {strides = array<i32>} : memref<1x8x286xf32, #tpu.memory_space<vmem>>, vector<1x8x286xf32>,
    %c0_34 = arith.constant 0 : index
    %c0_35 = arith.constant 0 : index
    %54 = vector.load %arg3[%c0_34, %c0_35] : memref<1x286xf32, #tpu.memory_space<vmem>>, vector<1x286xf32>
    %55 = vector.broadcast %54 : vector<1x286xf32> to vector<8x286xf32>
    %56 = arith.mulf %50, %55 : vector<8x286xf32>
    %c0_36 = arith.constant 0 : index
    %c0_37 = arith.constant 0 : index
    %57 = vector.load %arg5[%c0_36, %c0_37] : memref<8x1xf32, #tpu.memory_space<vmem>>, vector<8x1xf32>
    %cst_38 = arith.constant dense<0.000000e+00> : vector<8xf32>
    %58 = vector.multi_reduction <add>, %56, %cst_38 [1] : vector<8x286xf32> to vector<8xf32>
    %59 = vector.shape_cast %58 : vector<8xf32> to vector<8x1xf32>
    %60 = arith.addf %57, %59 : vector<8x1xf32>
    %c0_39 = arith.constant 0 : index
    %c0_40 = arith.constant 0 : index
    %61 = vector.load %arg5[%c0_39, %c0_40] : memref<8x1xf32, #tpu.memory_space<vmem>>, vector<8x1xf32>
    tpu.vector_store %arg5[%c0_39, %c0_40], %60 {strides = array<i32>} : memref<8x1xf32, #tpu.memory_space<vmem>>, vector<8x1xf32>,
    %c0_41 = arith.constant 0 : index
    %c0_42 = arith.constant 0 : index
    %62 = vector.load %arg6[%c0_41, %c0_42] : memref<8x1xf32, #tpu.memory_space<vmem>>, vector<8x1xf32>
    %63 = arith.mulf %56, %56 : vector<8x286xf32>
    %cst_43 = arith.constant dense<0.000000e+00> : vector<8xf32>
    %64 = vector.multi_reduction <add>, %63, %cst_43 [1] : vector<8x286xf32> to vector<8xf32>
    %65 = vector.shape_cast %64 : vector<8xf32> to vector<8x1xf32>
    %66 = arith.addf %62, %65 : vector<8x1xf32>
    %c0_44 = arith.constant 0 : index
    %c0_45 = arith.constant 0 : index
    %67 = vector.load %arg6[%c0_44, %c0_45] : memref<8x1xf32, #tpu.memory_space<vmem>>, vector<8x1xf32>
    tpu.vector_store %arg6[%c0_44, %c0_45], %66 {strides = array<i32>} : memref<8x1xf32, #tpu.memory_space<vmem>>, vector<8x1xf32>,
    return
  }
  func.func @transform_0(%arg0: i32) -> (i32, i32, i32) {
    %c0_i32 = arith.constant 0 : i32
    %c0_i32_0 = arith.constant 0 : i32
    %c0_i32_1 = arith.constant 0 : i32
    return %arg0, %c0_i32, %c0_i32_0 : i32, i32, i32
  }
  func.func @transform_1(%arg0: i32) -> (i32, i32, i32) {
    %c0_i32 = arith.constant 0 : i32
    %c0_i32_0 = arith.constant 0 : i32
    %c0_i32_1 = arith.constant 0 : i32
    %c0_i32_2 = arith.constant 0 : i32
    return %c0_i32, %c0_i32_0, %c0_i32_1 : i32, i32, i32
  }
  func.func @transform_2(%arg0: i32) -> (i32, i32) {
    %c0_i32 = arith.constant 0 : i32
    %c0_i32_0 = arith.constant 0 : i32
    %c0_i32_1 = arith.constant 0 : i32
    return %c0_i32, %c0_i32_0 : i32, i32
  }
  func.func @transform_3(%arg0: i32) -> (i32, i32, i32) {
    %c0_i32 = arith.constant 0 : i32
    %c0_i32_0 = arith.constant 0 : i32
    %c0_i32_1 = arith.constant 0 : i32
    return %arg0, %c0_i32, %c0_i32_0 : i32, i32, i32
  }
  func.func @transform_4(%arg0: i32) -> (i32, i32) {
    %c0_i32 = arith.constant 0 : i32
    %c0_i32_0 = arith.constant 0 : i32
    %c0_i32_1 = arith.constant 0 : i32
    return %c0_i32, %c0_i32_0 : i32, i32
  }
  func.func @transform_5(%arg0: i32) -> (i32, i32) {
    %c0_i32 = arith.constant 0 : i32
    %c0_i32_0 = arith.constant 0 : i32
    %c0_i32_1 = arith.constant 0 : i32
    return %c0_i32, %c0_i32_0 : i32, i32
  }
}

module attributes {stable_mosaic.version = 11 : i64} {
  func.func @_bn_relu_kernel(%arg0: i32, %arg1: memref<1x8x286xf32, #tpu.memory_space<vmem>>, %arg2: memref<8x1xf32, #tpu.memory_space<vmem>>, %arg3: memref<8x1xf32, #tpu.memory_space<vmem>>, %arg4: memref<1x8x286xf32, #tpu.memory_space<vmem>>) attributes {dimension_semantics = [#tpu.dimension_semantics<parallel>], iteration_bounds = array<i64: 2>, scalar_prefetch = 0 : i64, scratch_operands = 0 : i64, tpu.core_type = #tpu.core_type<tc>, window_params = [{transform_indices = @transform_0, window_bounds = array<i64: 1, 8, 286>}, {pipeline_mode = #tpu.pipeline_mode<synchronous>, transform_indices = @transform_1, window_bounds = array<i64: 8, 1>}, {pipeline_mode = #tpu.pipeline_mode<synchronous>, transform_indices = @transform_2, window_bounds = array<i64: 8, 1>}, {transform_indices = @transform_3, window_bounds = array<i64: 1, 8, 286>}]} {
    %c0 = arith.constant 0 : index
    %c0_0 = arith.constant 0 : index
    %c0_1 = arith.constant 0 : index
    %0 = vector.load %arg1[%c0, %c0_0, %c0_1] : memref<1x8x286xf32, #tpu.memory_space<vmem>>, vector<1x8x286xf32>
    %1 = vector.shape_cast %0 : vector<1x8x286xf32> to vector<8x286xf32>
    %c0_2 = arith.constant 0 : index
    %c0_3 = arith.constant 0 : index
    %2 = vector.load %arg2[%c0_2, %c0_3] : memref<8x1xf32, #tpu.memory_space<vmem>>, vector<8x1xf32>
    %3 = vector.broadcast %2 : vector<8x1xf32> to vector<8x286xf32>
    %4 = arith.mulf %1, %3 : vector<8x286xf32>
    %c0_4 = arith.constant 0 : index
    %c0_5 = arith.constant 0 : index
    %5 = vector.load %arg3[%c0_4, %c0_5] : memref<8x1xf32, #tpu.memory_space<vmem>>, vector<8x1xf32>
    %6 = vector.broadcast %5 : vector<8x1xf32> to vector<8x286xf32>
    %7 = arith.addf %4, %6 : vector<8x286xf32>
    %cst = arith.constant 0.000000e+00 : f32
    %8 = vector.broadcast %cst : f32 to vector<8x286xf32>
    %9 = arith.maximumf %7, %8 : vector<8x286xf32>
    %c0_6 = arith.constant 0 : index
    %c0_7 = arith.constant 0 : index
    %c0_8 = arith.constant 0 : index
    %10 = vector.load %arg4[%c0_6, %c0_7, %c0_8] : memref<1x8x286xf32, #tpu.memory_space<vmem>>, vector<1x8x286xf32>
    %11 = vector.shape_cast %10 : vector<1x8x286xf32> to vector<8x286xf32>
    %12 = vector.shape_cast %9 : vector<8x286xf32> to vector<1x8x286xf32>
    tpu.vector_store %arg4[%c0_6, %c0_7, %c0_8], %12 {strides = array<i32>} : memref<1x8x286xf32, #tpu.memory_space<vmem>>, vector<1x8x286xf32>,
    return
  }
  func.func @transform_0(%arg0: i32) -> (i32, i32, i32) {
    %c0_i32 = arith.constant 0 : i32
    %c0_i32_0 = arith.constant 0 : i32
    %c0_i32_1 = arith.constant 0 : i32
    return %arg0, %c0_i32, %c0_i32_0 : i32, i32, i32
  }
  func.func @transform_1(%arg0: i32) -> (i32, i32) {
    %c0_i32 = arith.constant 0 : i32
    %c0_i32_0 = arith.constant 0 : i32
    %c0_i32_1 = arith.constant 0 : i32
    return %c0_i32, %c0_i32_0 : i32, i32
  }
  func.func @transform_2(%arg0: i32) -> (i32, i32) {
    %c0_i32 = arith.constant 0 : i32
    %c0_i32_0 = arith.constant 0 : i32
    %c0_i32_1 = arith.constant 0 : i32
    return %c0_i32, %c0_i32_0 : i32, i32
  }
  func.func @transform_3(%arg0: i32) -> (i32, i32, i32) {
    %c0_i32 = arith.constant 0 : i32
    %c0_i32_0 = arith.constant 0 : i32
    %c0_i32_1 = arith.constant 0 : i32
    return %arg0, %c0_i32, %c0_i32_0 : i32, i32, i32
  }
}

module attributes {stable_mosaic.version = 11 : i64} {
  func.func @kernel(%arg0: i32, %arg1: memref<1x8x324xf32, #tpu.memory_space<vmem>>, %arg2: memref<9x8x8xf32, #tpu.memory_space<vmem>>, %arg3: memref<1x286xf32, #tpu.memory_space<vmem>>, %arg4: memref<1x8x286xf32, #tpu.memory_space<vmem>>, %arg5: memref<8x1xf32, #tpu.memory_space<vmem>>, %arg6: memref<8x1xf32, #tpu.memory_space<vmem>>) attributes {dimension_semantics = [#tpu.dimension_semantics<arbitrary>], iteration_bounds = array<i64: 2>, scalar_prefetch = 0 : i64, scratch_operands = 0 : i64, tpu.core_type = #tpu.core_type<tc>, window_params = [{transform_indices = @transform_0, window_bounds = array<i64: 1, 8, 324>}, {pipeline_mode = #tpu.pipeline_mode<synchronous>, transform_indices = @transform_1, window_bounds = array<i64: 9, 8, 8>}, {pipeline_mode = #tpu.pipeline_mode<synchronous>, transform_indices = @transform_2, window_bounds = array<i64: 1, 286>}, {transform_indices = @transform_3, window_bounds = array<i64: 1, 8, 286>}, {pipeline_mode = #tpu.pipeline_mode<synchronous>, transform_indices = @transform_4, window_bounds = array<i64: 8, 1>}, {pipeline_mode = #tpu.pipeline_mode<synchronous>, transform_indices = @transform_5, window_bounds = array<i64: 8, 1>}]} {
    %c0_i32 = arith.constant 0 : i32
    %0 = arith.cmpi eq, %arg0, %c0_i32 : i32
    %1 = arith.extui %0 : i1 to i32
    %c0_i32_0 = arith.constant 0 : i32
    %2 = arith.cmpi ne, %1, %c0_i32_0 : i32
    scf.if %2 {
      %cst_46 = arith.constant 0.000000e+00 : f32
      %68 = vector.broadcast %cst_46 : f32 to vector<8x1xf32>
      %c0_47 = arith.constant 0 : index
      %c0_48 = arith.constant 0 : index
      %69 = vector.load %arg5[%c0_47, %c0_48] : memref<8x1xf32, #tpu.memory_space<vmem>>, vector<8x1xf32>
      tpu.vector_store %arg5[%c0_47, %c0_48], %68 {strides = array<i32>} : memref<8x1xf32, #tpu.memory_space<vmem>>, vector<8x1xf32>,
      %cst_49 = arith.constant 0.000000e+00 : f32
      %70 = vector.broadcast %cst_49 : f32 to vector<8x1xf32>
      %c0_50 = arith.constant 0 : index
      %c0_51 = arith.constant 0 : index
      %71 = vector.load %arg6[%c0_50, %c0_51] : memref<8x1xf32, #tpu.memory_space<vmem>>, vector<8x1xf32>
      tpu.vector_store %arg6[%c0_50, %c0_51], %70 {strides = array<i32>} : memref<8x1xf32, #tpu.memory_space<vmem>>, vector<8x1xf32>,
    } else {
    }
    %c0 = arith.constant 0 : index
    %c0_1 = arith.constant 0 : index
    %c0_2 = arith.constant 0 : index
    %3 = vector.load %arg1[%c0, %c0_1, %c0_2] : memref<1x8x324xf32, #tpu.memory_space<vmem>>, vector<1x8x324xf32>
    %4 = vector.shape_cast %3 : vector<1x8x324xf32> to vector<8x324xf32>
    %cst = arith.constant 0.000000e+00 : f32
    %5 = vector.broadcast %cst : f32 to vector<8x286xf32>
    %6 = vector.extract_strided_slice %4 {offsets = [0, 0], sizes = [8, 286], strides = [1, 1]} : vector<8x324xf32> to vector<8x286xf32>
    %c0_3 = arith.constant 0 : index
    %c0_4 = arith.constant 0 : index
    %c0_5 = arith.constant 0 : index
    %7 = vector.load %arg2[%c0_3, %c0_4, %c0_5] : memref<9x8x8xf32, #tpu.memory_space<vmem>>, vector<1x8x8xf32>
    %8 = vector.shape_cast %7 : vector<1x8x8xf32> to vector<8x8xf32>
    %cst_6 = arith.constant dense<0.000000e+00> : vector<8x286xf32>
    %9 = tpu.matmul %8, %6, %cst_6 {dimension_numbers = #tpu.dot_dimension_numbers<[1], [0], [0], [1], [0, 0, 1, 1], [], []>} : vector<8x8xf32>, vector<8x286xf32>, vector<8x286xf32> -> vector<8x286xf32>
    %10 = arith.addf %5, %9 : vector<8x286xf32>
    %11 = vector.extract_strided_slice %4 {offsets = [0, 1], sizes = [8, 286], strides = [1, 1]} : vector<8x324xf32> to vector<8x286xf32>
    %c1 = arith.constant 1 : index
    %c0_7 = arith.constant 0 : index
    %c0_8 = arith.constant 0 : index
    %12 = vector.load %arg2[%c1, %c0_7, %c0_8] : memref<9x8x8xf32, #tpu.memory_space<vmem>>, vector<1x8x8xf32>
    %13 = vector.shape_cast %12 : vector<1x8x8xf32> to vector<8x8xf32>
    %cst_9 = arith.constant dense<0.000000e+00> : vector<8x286xf32>
    %14 = tpu.matmul %13, %11, %cst_9 {dimension_numbers = #tpu.dot_dimension_numbers<[1], [0], [0], [1], [0, 0, 1, 1], [], []>} : vector<8x8xf32>, vector<8x286xf32>, vector<8x286xf32> -> vector<8x286xf32>
    %15 = arith.addf %10, %14 : vector<8x286xf32>
    %16 = vector.extract_strided_slice %4 {offsets = [0, 2], sizes = [8, 286], strides = [1, 1]} : vector<8x324xf32> to vector<8x286xf32>
    %c2 = arith.constant 2 : index
    %c0_10 = arith.constant 0 : index
    %c0_11 = arith.constant 0 : index
    %17 = vector.load %arg2[%c2, %c0_10, %c0_11] : memref<9x8x8xf32, #tpu.memory_space<vmem>>, vector<1x8x8xf32>
    %18 = vector.shape_cast %17 : vector<1x8x8xf32> to vector<8x8xf32>
    %cst_12 = arith.constant dense<0.000000e+00> : vector<8x286xf32>
    %19 = tpu.matmul %18, %16, %cst_12 {dimension_numbers = #tpu.dot_dimension_numbers<[1], [0], [0], [1], [0, 0, 1, 1], [], []>} : vector<8x8xf32>, vector<8x286xf32>, vector<8x286xf32> -> vector<8x286xf32>
    %20 = arith.addf %15, %19 : vector<8x286xf32>
    %21 = vector.extract_strided_slice %4 {offsets = [0, 18], sizes = [8, 286], strides = [1, 1]} : vector<8x324xf32> to vector<8x286xf32>
    %c3 = arith.constant 3 : index
    %c0_13 = arith.constant 0 : index
    %c0_14 = arith.constant 0 : index
    %22 = vector.load %arg2[%c3, %c0_13, %c0_14] : memref<9x8x8xf32, #tpu.memory_space<vmem>>, vector<1x8x8xf32>
    %23 = vector.shape_cast %22 : vector<1x8x8xf32> to vector<8x8xf32>
    %cst_15 = arith.constant dense<0.000000e+00> : vector<8x286xf32>
    %24 = tpu.matmul %23, %21, %cst_15 {dimension_numbers = #tpu.dot_dimension_numbers<[1], [0], [0], [1], [0, 0, 1, 1], [], []>} : vector<8x8xf32>, vector<8x286xf32>, vector<8x286xf32> -> vector<8x286xf32>
    %25 = arith.addf %20, %24 : vector<8x286xf32>
    %26 = vector.extract_strided_slice %4 {offsets = [0, 19], sizes = [8, 286], strides = [1, 1]} : vector<8x324xf32> to vector<8x286xf32>
    %c4 = arith.constant 4 : index
    %c0_16 = arith.constant 0 : index
    %c0_17 = arith.constant 0 : index
    %27 = vector.load %arg2[%c4, %c0_16, %c0_17] : memref<9x8x8xf32, #tpu.memory_space<vmem>>, vector<1x8x8xf32>
    %28 = vector.shape_cast %27 : vector<1x8x8xf32> to vector<8x8xf32>
    %cst_18 = arith.constant dense<0.000000e+00> : vector<8x286xf32>
    %29 = tpu.matmul %28, %26, %cst_18 {dimension_numbers = #tpu.dot_dimension_numbers<[1], [0], [0], [1], [0, 0, 1, 1], [], []>} : vector<8x8xf32>, vector<8x286xf32>, vector<8x286xf32> -> vector<8x286xf32>
    %30 = arith.addf %25, %29 : vector<8x286xf32>
    %31 = vector.extract_strided_slice %4 {offsets = [0, 20], sizes = [8, 286], strides = [1, 1]} : vector<8x324xf32> to vector<8x286xf32>
    %c5 = arith.constant 5 : index
    %c0_19 = arith.constant 0 : index
    %c0_20 = arith.constant 0 : index
    %32 = vector.load %arg2[%c5, %c0_19, %c0_20] : memref<9x8x8xf32, #tpu.memory_space<vmem>>, vector<1x8x8xf32>
    %33 = vector.shape_cast %32 : vector<1x8x8xf32> to vector<8x8xf32>
    %cst_21 = arith.constant dense<0.000000e+00> : vector<8x286xf32>
    %34 = tpu.matmul %33, %31, %cst_21 {dimension_numbers = #tpu.dot_dimension_numbers<[1], [0], [0], [1], [0, 0, 1, 1], [], []>} : vector<8x8xf32>, vector<8x286xf32>, vector<8x286xf32> -> vector<8x286xf32>
    %35 = arith.addf %30, %34 : vector<8x286xf32>
    %36 = vector.extract_strided_slice %4 {offsets = [0, 36], sizes = [8, 286], strides = [1, 1]} : vector<8x324xf32> to vector<8x286xf32>
    %c6 = arith.constant 6 : index
    %c0_22 = arith.constant 0 : index
    %c0_23 = arith.constant 0 : index
    %37 = vector.load %arg2[%c6, %c0_22, %c0_23] : memref<9x8x8xf32, #tpu.memory_space<vmem>>, vector<1x8x8xf32>
    %38 = vector.shape_cast %37 : vector<1x8x8xf32> to vector<8x8xf32>
    %cst_24 = arith.constant dense<0.000000e+00> : vector<8x286xf32>
    %39 = tpu.matmul %38, %36, %cst_24 {dimension_numbers = #tpu.dot_dimension_numbers<[1], [0], [0], [1], [0, 0, 1, 1], [], []>} : vector<8x8xf32>, vector<8x286xf32>, vector<8x286xf32> -> vector<8x286xf32>
    %40 = arith.addf %35, %39 : vector<8x286xf32>
    %41 = vector.extract_strided_slice %4 {offsets = [0, 37], sizes = [8, 286], strides = [1, 1]} : vector<8x324xf32> to vector<8x286xf32>
    %c7 = arith.constant 7 : index
    %c0_25 = arith.constant 0 : index
    %c0_26 = arith.constant 0 : index
    %42 = vector.load %arg2[%c7, %c0_25, %c0_26] : memref<9x8x8xf32, #tpu.memory_space<vmem>>, vector<1x8x8xf32>
    %43 = vector.shape_cast %42 : vector<1x8x8xf32> to vector<8x8xf32>
    %cst_27 = arith.constant dense<0.000000e+00> : vector<8x286xf32>
    %44 = tpu.matmul %43, %41, %cst_27 {dimension_numbers = #tpu.dot_dimension_numbers<[1], [0], [0], [1], [0, 0, 1, 1], [], []>} : vector<8x8xf32>, vector<8x286xf32>, vector<8x286xf32> -> vector<8x286xf32>
    %45 = arith.addf %40, %44 : vector<8x286xf32>
    %46 = vector.extract_strided_slice %4 {offsets = [0, 38], sizes = [8, 286], strides = [1, 1]} : vector<8x324xf32> to vector<8x286xf32>
    %c8 = arith.constant 8 : index
    %c0_28 = arith.constant 0 : index
    %c0_29 = arith.constant 0 : index
    %47 = vector.load %arg2[%c8, %c0_28, %c0_29] : memref<9x8x8xf32, #tpu.memory_space<vmem>>, vector<1x8x8xf32>
    %48 = vector.shape_cast %47 : vector<1x8x8xf32> to vector<8x8xf32>
    %cst_30 = arith.constant dense<0.000000e+00> : vector<8x286xf32>
    %49 = tpu.matmul %48, %46, %cst_30 {dimension_numbers = #tpu.dot_dimension_numbers<[1], [0], [0], [1], [0, 0, 1, 1], [], []>} : vector<8x8xf32>, vector<8x286xf32>, vector<8x286xf32> -> vector<8x286xf32>
    %50 = arith.addf %45, %49 : vector<8x286xf32>
    %c0_31 = arith.constant 0 : index
    %c0_32 = arith.constant 0 : index
    %c0_33 = arith.constant 0 : index
    %51 = vector.load %arg4[%c0_31, %c0_32, %c0_33] : memref<1x8x286xf32, #tpu.memory_space<vmem>>, vector<1x8x286xf32>
    %52 = vector.shape_cast %51 : vector<1x8x286xf32> to vector<8x286xf32>
    %53 = vector.shape_cast %50 : vector<8x286xf32> to vector<1x8x286xf32>
    tpu.vector_store %arg4[%c0_31, %c0_32, %c0_33], %53 {strides = array<i32>} : memref<1x8x286xf32, #tpu.memory_space<vmem>>, vector<1x8x286xf32>,
    %c0_34 = arith.constant 0 : index
    %c0_35 = arith.constant 0 : index
    %54 = vector.load %arg3[%c0_34, %c0_35] : memref<1x286xf32, #tpu.memory_space<vmem>>, vector<1x286xf32>
    %55 = vector.broadcast %54 : vector<1x286xf32> to vector<8x286xf32>
    %56 = arith.mulf %50, %55 : vector<8x286xf32>
    %c0_36 = arith.constant 0 : index
    %c0_37 = arith.constant 0 : index
    %57 = vector.load %arg5[%c0_36, %c0_37] : memref<8x1xf32, #tpu.memory_space<vmem>>, vector<8x1xf32>
    %cst_38 = arith.constant dense<0.000000e+00> : vector<8xf32>
    %58 = vector.multi_reduction <add>, %56, %cst_38 [1] : vector<8x286xf32> to vector<8xf32>
    %59 = vector.shape_cast %58 : vector<8xf32> to vector<8x1xf32>
    %60 = arith.addf %57, %59 : vector<8x1xf32>
    %c0_39 = arith.constant 0 : index
    %c0_40 = arith.constant 0 : index
    %61 = vector.load %arg5[%c0_39, %c0_40] : memref<8x1xf32, #tpu.memory_space<vmem>>, vector<8x1xf32>
    tpu.vector_store %arg5[%c0_39, %c0_40], %60 {strides = array<i32>} : memref<8x1xf32, #tpu.memory_space<vmem>>, vector<8x1xf32>,
    %c0_41 = arith.constant 0 : index
    %c0_42 = arith.constant 0 : index
    %62 = vector.load %arg6[%c0_41, %c0_42] : memref<8x1xf32, #tpu.memory_space<vmem>>, vector<8x1xf32>
    %63 = arith.mulf %56, %56 : vector<8x286xf32>
    %cst_43 = arith.constant dense<0.000000e+00> : vector<8xf32>
    %64 = vector.multi_reduction <add>, %63, %cst_43 [1] : vector<8x286xf32> to vector<8xf32>
    %65 = vector.shape_cast %64 : vector<8xf32> to vector<8x1xf32>
    %66 = arith.addf %62, %65 : vector<8x1xf32>
    %c0_44 = arith.constant 0 : index
    %c0_45 = arith.constant 0 : index
    %67 = vector.load %arg6[%c0_44, %c0_45] : memref<8x1xf32, #tpu.memory_space<vmem>>, vector<8x1xf32>
    tpu.vector_store %arg6[%c0_44, %c0_45], %66 {strides = array<i32>} : memref<8x1xf32, #tpu.memory_space<vmem>>, vector<8x1xf32>,
    return
  }
  func.func @transform_0(%arg0: i32) -> (i32, i32, i32) {
    %c0_i32 = arith.constant 0 : i32
    %c0_i32_0 = arith.constant 0 : i32
    %c0_i32_1 = arith.constant 0 : i32
    return %arg0, %c0_i32, %c0_i32_0 : i32, i32, i32
  }
  func.func @transform_1(%arg0: i32) -> (i32, i32, i32) {
    %c0_i32 = arith.constant 0 : i32
    %c0_i32_0 = arith.constant 0 : i32
    %c0_i32_1 = arith.constant 0 : i32
    %c0_i32_2 = arith.constant 0 : i32
    return %c0_i32, %c0_i32_0, %c0_i32_1 : i32, i32, i32
  }
  func.func @transform_2(%arg0: i32) -> (i32, i32) {
    %c0_i32 = arith.constant 0 : i32
    %c0_i32_0 = arith.constant 0 : i32
    %c0_i32_1 = arith.constant 0 : i32
    return %c0_i32, %c0_i32_0 : i32, i32
  }
  func.func @transform_3(%arg0: i32) -> (i32, i32, i32) {
    %c0_i32 = arith.constant 0 : i32
    %c0_i32_0 = arith.constant 0 : i32
    %c0_i32_1 = arith.constant 0 : i32
    return %arg0, %c0_i32, %c0_i32_0 : i32, i32, i32
  }
  func.func @transform_4(%arg0: i32) -> (i32, i32) {
    %c0_i32 = arith.constant 0 : i32
    %c0_i32_0 = arith.constant 0 : i32
    %c0_i32_1 = arith.constant 0 : i32
    return %c0_i32, %c0_i32_0 : i32, i32
  }
  func.func @transform_5(%arg0: i32) -> (i32, i32) {
    %c0_i32 = arith.constant 0 : i32
    %c0_i32_0 = arith.constant 0 : i32
    %c0_i32_1 = arith.constant 0 : i32
    return %c0_i32, %c0_i32_0 : i32, i32
  }
}

</mosaic_0001>

<llo_original>
// kernel: en_conv_block_forward.5
$region0: #{en_conv_block_forward.5}
  #allocation0 [shape = 'u32[]', space=smem, size = 0x4, offset = 0x4, fixed_abs, tag = 'smem constant byte address 0x4 - core index']
  #allocation1 [shape = 'u32[72,128]{1,0:T(1,128)}', space=vmem, size = 0x9000, scoped, tag = 'internal scratch']
  %s0 = inlined_call_operand.vmem [shape: f32[2,8,286], index: 0, kind: input, shape index: {}]
  %s1 = inlined_call_operand.vmem [shape: f32[8,1], index: 1, kind: input, shape index: {}]
  %s2 = inlined_call_operand.vmem [shape: f32[8,1], index: 2, kind: input, shape index: {}]
  %s3 = inlined_call_operand.vmem [shape: f32[2,8,286], index: 3, kind: output, shape index: {}]
  %s4 = sld [smem:[#allocation0]]
  $region45: #{en_conv_block_forward.5} parent=0
    _
  %s6 = ssub.s32 1, %s4
  %s7 = scalar_select 0, %s6, %s4
  loop: start=0, step=1, limit=4
  $region2: #{en_conv_block_forward.5} parent=0 // loop_pre_header
    _
  $region3: #{en_conv_block_forward.5} parent=0 // loop_header
    %s9 = sphi 0, %s13
    %p10 = scmp.ge.s32.totalorder %s9, 4
    %s19 = sphi 0, %s21
    %s22 = sphi 0, %s19
    %s23 = sphi 0, %s22
    %s39 = sphi 0, %s23
    %s43 = sphi 0, %s43
    %s45 = sphi 0, %s43
    %s46 = sphi 0, %s45
    %s60 = sphi 0, %s46
    %s64 = sphi 0, %s64
    %s66 = sphi 0, %s64
    %s67 = sphi 0, %s66
    %s81 = sphi 0, %s67
    %s87 = sphi 0, %s89
    %s90 = sphi 0, %s87
    %s91 = sphi 0, %s90
    %s107 = sphi 0, %s91
  $region4: #{en_conv_block_forward.5} parent=0 // loop_header_branch
    %12 = sbr.rel (%p10) target = $region8
  $region5: #{en_conv_block_forward.5} parent=0 // loop_body
    %s14 = ssub.s32 %s9, 1
    %s15 = ssub.s32 %s9, 2
    %s16 = sadd.s32 %s9, 1
    %s17 = ssub.s32 %s9, %s16
    %p18 = scmp.eq.s32.totalorder %s17, 0
    %s20 = sadd.s32 %s19, 1
    %s21 = scalar_select %p18, %s19, %s20
    %p24 = pneg %p18
    %p25 = scmp.eq.s32.totalorder %s9, 1
    %p26 = por %p24, %p25
    %p27 = scmp.ne.s32.totalorder %s19, %s22
    %p28 = scmp.eq.s32.totalorder %s9, 0
    %p29 = por %p27, %p28
    %p30 = scmp.ne.s32.totalorder %s19, %s22
    %p31 = scmp.eq.s32.totalorder %s14, 1
    %p32 = por %p30, %p31
    %p33 = scmp.ne.s32.totalorder %s22, %s23
    %p34 = scmp.eq.s32.totalorder %s14, 0
    %p35 = por %p33, %p34
    %p36 = scmp.ne.s32.totalorder %s22, %s23
    %p37 = scmp.eq.s32.totalorder %s15, 1
    %p38 = por %p36, %p37
    %p40 = scmp.ne.s32.totalorder %s23, %s39
    %p41 = scmp.eq.s32.totalorder %s15, 0
    %p42 = por %p40, %p41
    %s44 = sadd.s32 %s43, 1
    %p47 = scmp.eq.s32.totalorder %s9, 1
    %p48 = scmp.ne.s32.totalorder %s43, %s45
    %p49 = scmp.eq.s32.totalorder %s9, 0
    %p50 = por %p48, %p49
    %p51 = scmp.ne.s32.totalorder %s43, %s45
    %p52 = scmp.eq.s32.totalorder %s14, 1
    %p53 = por %p51, %p52
    %p54 = scmp.ne.s32.totalorder %s45, %s46
    %p55 = scmp.eq.s32.totalorder %s14, 0
    %p56 = por %p54, %p55
    %p57 = scmp.ne.s32.totalorder %s45, %s46
    %p58 = scmp.eq.s32.totalorder %s15, 1
    %p59 = por %p57, %p58
    %p61 = scmp.ne.s32.totalorder %s46, %s60
    %p62 = scmp.eq.s32.totalorder %s15, 0
    %p63 = por %p61, %p62
    %s65 = sadd.s32 %s64, 1
    %p68 = scmp.eq.s32.totalorder %s9, 1
    %p69 = scmp.ne.s32.totalorder %s64, %s66
    %p70 = scmp.eq.s32.totalorder %s9, 0
    %p71 = por %p69, %p70
    %p72 = scmp.ne.s32.totalorder %s64, %s66
    %p73 = scmp.eq.s32.totalorder %s14, 1
    %p74 = por %p72, %p73
    %p75 = scmp.ne.s32.totalorder %s66, %s67
    %p76 = scmp.eq.s32.totalorder %s14, 0
    %p77 = por %p75, %p76
    %p78 = scmp.ne.s32.totalorder %s66, %s67
    %p79 = scmp.eq.s32.totalorder %s15, 1
    %p80 = por %p78, %p79
    %p82 = scmp.ne.s32.totalorder %s67, %s81
    %p83 = scmp.eq.s32.totalorder %s15, 0
    %p84 = por %p82, %p83
    %s85 = ssub.s32 %s9, %s16
    %p86 = scmp.eq.s32.totalorder %s85, 0
    %s88 = sadd.s32 %s87, 1
    %s89 = scalar_select %p86, %s87, %s88
    %p92 = pneg %p86
    %p93 = scmp.eq.s32.totalorder %s9, 1
    %p94 = por %p92, %p93
    %p95 = scmp.ne.s32.totalorder %s87, %s90
    %p96 = scmp.eq.s32.totalorder %s9, 0
    %p97 = por %p95, %p96
    %p98 = scmp.ne.s32.totalorder %s87, %s90
    %p99 = scmp.eq.s32.totalorder %s14, 1
    %p100 = por %p98, %p99
    %p101 = scmp.ne.s32.totalorder %s90, %s91
    %p102 = scmp.eq.s32.totalorder %s14, 0
    %p103 = por %p101, %p102
    %p104 = scmp.ne.s32.totalorder %s90, %s91
    %p105 = scmp.eq.s32.totalorder %s15, 1
    %p106 = por %p104, %p105
    %p108 = scmp.ne.s32.totalorder %s91, %s107
    %p109 = scmp.eq.s32.totalorder %s15, 0
    %p110 = por %p108, %p109
    %p111 = scmp.le.s32.totalorder 1, %s9
    %p112 = scmp.lt.s32.totalorder %s9, 3
    %p113 = pnand %p111, %p112
    %p114 = pneg %p113
    // Predicated region
    $region9: #{en_conv_block_forward.5} parent=5 // pred_check
      _
    $region10: #{en_conv_block_forward.5} parent=5 // pred_check_branch
      %116 = sbr.rel (%p113) target = $region12
    $region11: #{en_conv_block_forward.5} parent=5 // pred_region
      %s117 = ssub.s32 %s9, 1
      // Predicated region
      $region13: #{en_conv_block_forward.5} parent=11 // pred_check
        %p118 = pneg %p56
      $region14: #{en_conv_block_forward.5} parent=11 // pred_check_branch
        %120 = sbr.rel (%p118) target = $region16
      $region15: #{en_conv_block_forward.5} parent=11 // pred_region
        _
      $region16: #{en_conv_block_forward.5} parent=11 // pred_fallthru
        _
      // Predicated region
      $region17: #{en_conv_block_forward.5} parent=11 // pred_check
        %p121 = pneg %p77
      $region18: #{en_conv_block_forward.5} parent=11 // pred_check_branch
        %123 = sbr.rel (%p121) target = $region20
      $region19: #{en_conv_block_forward.5} parent=11 // pred_region
        _
      $region20: #{en_conv_block_forward.5} parent=11 // pred_fallthru
        _
    $region12: #{en_conv_block_forward.5} parent=5 // pred_fallthru
      _
    %p124 = scmp.lt.s32.totalorder %s9, 2
    // Predicated region
    $region21: #{en_conv_block_forward.5} parent=5 // pred_check
      %p125 = pneg %p124
    $region22: #{en_conv_block_forward.5} parent=5 // pred_check_branch
      %127 = sbr.rel (%p125) target = $region24
    $region23: #{en_conv_block_forward.5} parent=5 // pred_region
      // Predicated region
      $region25: #{en_conv_block_forward.5} parent=23 // pred_check
        %p128 = pneg %p29
      $region26: #{en_conv_block_forward.5} parent=23 // pred_check_branch
        %130 = sbr.rel (%p128) target = $region28
      $region27: #{en_conv_block_forward.5} parent=23 // pred_region
        %p131 = scmp.lt.s32.totalorder %s9, 1
        %s132 = scalar_select %p131, %s9, 1
        %s133 = smul.addr %s132, 3
        %s134 = smul.addr %s133, 8
        %s135 = scalar_lea.vmem %s0, %s134
      $region28: #{en_conv_block_forward.5} parent=23 // pred_fallthru
        _
    $region24: #{en_conv_block_forward.5} parent=5 // pred_fallthru
      _
    %p136 = scmp.le.s32.totalorder 1, %s9
    %p137 = scmp.lt.s32.totalorder %s9, 3
    %p138 = pnand %p136, %p137
    %p139 = pneg %p138
    // Predicated region
    $region29: #{en_conv_block_forward.5} parent=5 // pred_check
      _
    $region30: #{en_conv_block_forward.5} parent=5 // pred_check_branch
      %141 = sbr.rel (%p138) target = $region32
    $region31: #{en_conv_block_forward.5} parent=5 // pred_region
      %s142 = ssub.s32 %s9, 1
      %p143 = scmp.lt.s32.totalorder %s14, 1
      %s144 = scalar_select %p143, %s14, 1
      %s145 = smul.addr %s144, 3
      %s146 = smul.addr %s145, 8
      %s147 = scalar_lea.vmem %s0, %s146
      %p148 = pneg %p35
      %p149 = pneg %p32
      %p150 = pneg %p56
      %p151 = pneg %p53
      %p152 = pneg %p77
      %p153 = pneg %p74
      %p154 = pneg %p103
      %p155 = pneg %p100
      %p156 = scmp.lt.s32.totalorder %s14, 1
      %s157 = scalar_select %p156, %s14, 1
      %s158 = smul.addr %s157, 3
      %s159 = smul.addr %s158, 8
      %s160 = scalar_lea.vmem %s3, %s159
      %p161 = scmp.lt.s32.totalorder %s14, 1
      %s162 = scalar_select %p161, %s14, 1
      %s163 = smul.addr %s162, 3
      %s164 = smul.addr %s163, 8
      %s165 = scalar_lea.vmem %s0, %s164
      %p166 = scmp.lt.s32.totalorder %s14, 1
      %s167 = scalar_select %p166, %s14, 1
      %s168 = smul.addr %s167, 3
      %s169 = smul.addr %s168, 8
      %s170 = scalar_lea.vmem %s3, %s169
      %v171 = vld [vmem:[%s165] sm:$0xff]
      %v172 = vld [vmem:[%s165 + $0x8] sm:$0xff]
      %v173 = vld [vmem:[%s165 + $0x10] sm:$0xff]
      %v174 = vld [vmem:[%s1] sm:$0xff]
      %176 = vset.pattern.permute.xlu0 0
      %177 = vperm.xlu0 %176, %v174
      %v178 = vpop.permute.xlu0 %177
      %v180 = vmul.f32 %v171, %v178
      %v181 = vmul.f32 %v172, %v178
      %v182 = vmul.f32 %v173, %v178
      %v183 = vld [vmem:[%s2] sm:$0xff]
      %185 = vset.pattern.permute.xlu0 0
      %186 = vperm.xlu0 %185, %v183
      %v187 = vpop.permute.xlu0 %186
      %v189 = vadd.f32 %v180, %v187
      %v190 = vadd.f32 %v181, %v187
      %v191 = vadd.f32 %v182, %v187
      %v192 = vmax.f32 %v189, 0.0
      %v193 = vmax.f32 %v190, 0.0
      %v194 = vmax.f32 %v191, 0.0
      %195 = vst [vmem:[%s170] sm:$0xff] %v192
      %196 = vst [vmem:[%s170 + $0x8] sm:$0xff] %v193
      %vm197 = vcmask 244736
      %198 = vst.msk [vmem:[%s170 + $0x10] sm:$0xff] %vm197, %v194
      %p199 = scmp.lt.s32.totalorder %s14, 1
      %s200 = scalar_select %p199, %s14, 1
      %s201 = smul.addr %s200, 3
      %s202 = smul.addr %s201, 8
      %s203 = scalar_lea.vmem %s3, %s202
      // Predicated region
      $region33: #{en_conv_block_forward.5} parent=31 // pred_check
        %p204 = pneg %p100
      $region34: #{en_conv_block_forward.5} parent=31 // pred_check_branch
        %206 = sbr.rel (%p204) target = $region36
      $region35: #{en_conv_block_forward.5} parent=31 // pred_region
        _
      $region36: #{en_conv_block_forward.5} parent=31 // pred_fallthru
        _
    $region32: #{en_conv_block_forward.5} parent=5 // pred_fallthru
      _
    %p207 = scmp.le.s32.totalorder 2, %s9
    // Predicated region
    $region37: #{en_conv_block_forward.5} parent=5 // pred_check
      %p208 = pneg %p207
    $region38: #{en_conv_block_forward.5} parent=5 // pred_check_branch
      %210 = sbr.rel (%p208) target = $region40
    $region39: #{en_conv_block_forward.5} parent=5 // pred_region
      %s211 = ssub.s32 %s9, 2
      // Predicated region
      $region41: #{en_conv_block_forward.5} parent=39 // pred_check
        %p212 = pneg %p106
      $region42: #{en_conv_block_forward.5} parent=39 // pred_check_branch
        %214 = sbr.rel (%p212) target = $region44
      $region43: #{en_conv_block_forward.5} parent=39 // pred_region
        %p215 = scmp.lt.s32.totalorder %s15, 1
        %s216 = scalar_select %p215, %s15, 1
        %s217 = smul.addr %s216, 3
        %s218 = smul.addr %s217, 8
        %s219 = scalar_lea.vmem %s3, %s218
      $region44: #{en_conv_block_forward.5} parent=39 // pred_fallthru
        _
    $region40: #{en_conv_block_forward.5} parent=5 // pred_fallthru
      _
  $region6: #{en_conv_block_forward.5} parent=0 // loop_footer
    %s13 = sadd.s32 1, %s9
  $region7: #{en_conv_block_forward.5} parent=0 // loop_footer_branch
    %8 = sbr.rel target = $region3
  $region8: #{en_conv_block_forward.5} parent=0 // loop_exit
    _

// kernel: en_conv_block_forward.4
$region0: #{en_conv_block_forward.4}
  #allocation0 [shape = 'u32[]', space=smem, size = 0x4, offset = 0x4, fixed_abs, tag = 'smem constant byte address 0x4 - core index']
  #allocation1 [shape = 'u32[72,128]{1,0:T(1,128)}', space=vmem, size = 0x9000, scoped, tag = 'internal scratch']
  %s0 = inlined_call_operand.vmem [shape: f32[2,4,324], index: 0, kind: input, shape index: {}]
  %s1 = inlined_call_operand.vmem [shape: f32[9,8,4], index: 1, kind: input, shape index: {}]
  %s2 = inlined_call_operand.vmem [shape: f32[1,286], index: 2, kind: input, shape index: {}]
  %s3 = inlined_call_operand.vmem [shape: f32[2,8,286], index: 3, kind: output, shape index: {0}]
  %s4 = inlined_call_operand.vmem [shape: f32[8,1], index: 4, kind: output, shape index: {1}]
  %s5 = inlined_call_operand.vmem [shape: f32[8,1], index: 5, kind: output, shape index: {2}]
  %6 = xla_tuple %s3, %s4, %s5
  %s7 = sld [smem:[#allocation0]]
  $region65: #{en_conv_block_forward.4} parent=0
    _
  %s9 = ssub.s32 1, %s7
  %s10 = scalar_select 0, %s9, %s7
  loop: start=0, step=1, limit=4
  $region2: #{en_conv_block_forward.4} parent=0 // loop_pre_header
    _
  $region3: #{en_conv_block_forward.4} parent=0 // loop_header
    %s12 = sphi 0, %s16
    %p13 = scmp.ge.s32.totalorder %s12, 4
    %s22 = sphi 0, %s24
    %s25 = sphi 0, %s22
    %s26 = sphi 0, %s25
    %s42 = sphi 0, %s26
    %s46 = sphi 0, %s46
    %s48 = sphi 0, %s46
    %s49 = sphi 0, %s48
    %s63 = sphi 0, %s49
    %s67 = sphi 0, %s67
    %s69 = sphi 0, %s67
    %s70 = sphi 0, %s69
    %s84 = sphi 0, %s70
    %s90 = sphi 0, %s92
    %s93 = sphi 0, %s90
    %s94 = sphi 0, %s93
    %s110 = sphi 0, %s94
    %s114 = sphi 0, %s114
    %s116 = sphi 0, %s114
    %s117 = sphi 0, %s116
    %s131 = sphi 0, %s117
    %s135 = sphi 0, %s135
    %s137 = sphi 0, %s135
    %s138 = sphi 0, %s137
    %s152 = sphi 0, %s138
  $region4: #{en_conv_block_forward.4} parent=0 // loop_header_branch
    %15 = sbr.rel (%p13) target = $region8
  $region5: #{en_conv_block_forward.4} parent=0 // loop_body
    %s17 = ssub.s32 %s12, 1
    %s18 = ssub.s32 %s12, 2
    %s19 = sadd.s32 %s12, 1
    %s20 = ssub.s32 %s12, %s19
    %p21 = scmp.eq.s32.totalorder %s20, 0
    %s23 = sadd.s32 %s22, 1
    %s24 = scalar_select %p21, %s22, %s23
    %p27 = pneg %p21
    %p28 = scmp.eq.s32.totalorder %s12, 1
    %p29 = por %p27, %p28
    %p30 = scmp.ne.s32.totalorder %s22, %s25
    %p31 = scmp.eq.s32.totalorder %s12, 0
    %p32 = por %p30, %p31
    %p33 = scmp.ne.s32.totalorder %s22, %s25
    %p34 = scmp.eq.s32.totalorder %s17, 1
    %p35 = por %p33, %p34
    %p36 = scmp.ne.s32.totalorder %s25, %s26
    %p37 = scmp.eq.s32.totalorder %s17, 0
    %p38 = por %p36, %p37
    %p39 = scmp.ne.s32.totalorder %s25, %s26
    %p40 = scmp.eq.s32.totalorder %s18, 1
    %p41 = por %p39, %p40
    %p43 = scmp.ne.s32.totalorder %s26, %s42
    %p44 = scmp.eq.s32.totalorder %s18, 0
    %p45 = por %p43, %p44
    %s47 = sadd.s32 %s46, 1
    %p50 = scmp.eq.s32.totalorder %s12, 1
    %p51 = scmp.ne.s32.totalorder %s46, %s48
    %p52 = scmp.eq.s32.totalorder %s12, 0
    %p53 = por %p51, %p52
    %p54 = scmp.ne.s32.totalorder %s46, %s48
    %p55 = scmp.eq.s32.totalorder %s17, 1
    %p56 = por %p54, %p55
    %p57 = scmp.ne.s32.totalorder %s48, %s49
    %p58 = scmp.eq.s32.totalorder %s17, 0
    %p59 = por %p57, %p58
    %p60 = scmp.ne.s32.totalorder %s48, %s49
    %p61 = scmp.eq.s32.totalorder %s18, 1
    %p62 = por %p60, %p61
    %p64 = scmp.ne.s32.totalorder %s49, %s63
    %p65 = scmp.eq.s32.totalorder %s18, 0
    %p66 = por %p64, %p65
    %s68 = sadd.s32 %s67, 1
    %p71 = scmp.eq.s32.totalorder %s12, 1
    %p72 = scmp.ne.s32.totalorder %s67, %s69
    %p73 = scmp.eq.s32.totalorder %s12, 0
    %p74 = por %p72, %p73
    %p75 = scmp.ne.s32.totalorder %s67, %s69
    %p76 = scmp.eq.s32.totalorder %s17, 1
    %p77 = por %p75, %p76
    %p78 = scmp.ne.s32.totalorder %s69, %s70
    %p79 = scmp.eq.s32.totalorder %s17, 0
    %p80 = por %p78, %p79
    %p81 = scmp.ne.s32.totalorder %s69, %s70
    %p82 = scmp.eq.s32.totalorder %s18, 1
    %p83 = por %p81, %p82
    %p85 = scmp.ne.s32.totalorder %s70, %s84
    %p86 = scmp.eq.s32.totalorder %s18, 0
    %p87 = por %p85, %p86
    %s88 = ssub.s32 %s12, %s19
    %p89 = scmp.eq.s32.totalorder %s88, 0
    %s91 = sadd.s32 %s90, 1
    %s92 = scalar_select %p89, %s90, %s91
    %p95 = pneg %p89
    %p96 = scmp.eq.s32.totalorder %s12, 1
    %p97 = por %p95, %p96
    %p98 = scmp.ne.s32.totalorder %s90, %s93
    %p99 = scmp.eq.s32.totalorder %s12, 0
    %p100 = por %p98, %p99
    %p101 = scmp.ne.s32.totalorder %s90, %s93
    %p102 = scmp.eq.s32.totalorder %s17, 1
    %p103 = por %p101, %p102
    %p104 = scmp.ne.s32.totalorder %s93, %s94
    %p105 = scmp.eq.s32.totalorder %s17, 0
    %p106 = por %p104, %p105
    %p107 = scmp.ne.s32.totalorder %s93, %s94
    %p108 = scmp.eq.s32.totalorder %s18, 1
    %p109 = por %p107, %p108
    %p111 = scmp.ne.s32.totalorder %s94, %s110
    %p112 = scmp.eq.s32.totalorder %s18, 0
    %p113 = por %p111, %p112
    %s115 = sadd.s32 %s114, 1
    %p118 = scmp.eq.s32.totalorder %s12, 1
    %p119 = scmp.ne.s32.totalorder %s114, %s116
    %p120 = scmp.eq.s32.totalorder %s12, 0
    %p121 = por %p119, %p120
    %p122 = scmp.ne.s32.totalorder %s114, %s116
    %p123 = scmp.eq.s32.totalorder %s17, 1
    %p124 = por %p122, %p123
    %p125 = scmp.ne.s32.totalorder %s116, %s117
    %p126 = scmp.eq.s32.totalorder %s17, 0
    %p127 = por %p125, %p126
    %p128 = scmp.ne.s32.totalorder %s116, %s117
    %p129 = scmp.eq.s32.totalorder %s18, 1
    %p130 = por %p128, %p129
    %p132 = scmp.ne.s32.totalorder %s117, %s131
    %p133 = scmp.eq.s32.totalorder %s18, 0
    %p134 = por %p132, %p133
    %s136 = sadd.s32 %s135, 1
    %p139 = scmp.eq.s32.totalorder %s12, 1
    %p140 = scmp.ne.s32.totalorder %s135, %s137
    %p141 = scmp.eq.s32.totalorder %s12, 0
    %p142 = por %p140, %p141
    %p143 = scmp.ne.s32.totalorder %s135, %s137
    %p144 = scmp.eq.s32.totalorder %s17, 1
    %p145 = por %p143, %p144
    %p146 = scmp.ne.s32.totalorder %s137, %s138
    %p147 = scmp.eq.s32.totalorder %s17, 0
    %p148 = por %p146, %p147
    %p149 = scmp.ne.s32.totalorder %s137, %s138
    %p150 = scmp.eq.s32.totalorder %s18, 1
    %p151 = por %p149, %p150
    %p153 = scmp.ne.s32.totalorder %s138, %s152
    %p154 = scmp.eq.s32.totalorder %s18, 0
    %p155 = por %p153, %p154
    %p156 = scmp.le.s32.totalorder 1, %s12
    %p157 = scmp.lt.s32.totalorder %s12, 3
    %p158 = pnand %p156, %p157
    %p159 = pneg %p158
    // Predicated region
    $region9: #{en_conv_block_forward.4} parent=5 // pred_check
      _
    $region10: #{en_conv_block_forward.4} parent=5 // pred_check_branch
      %161 = sbr.rel (%p158) target = $region12
    $region11: #{en_conv_block_forward.4} parent=5 // pred_region
      %s162 = ssub.s32 %s12, 1
      // Predicated region
      $region13: #{en_conv_block_forward.4} parent=11 // pred_check
        %p163 = pneg %p59
      $region14: #{en_conv_block_forward.4} parent=11 // pred_check_branch
        %165 = sbr.rel (%p163) target = $region16
      $region15: #{en_conv_block_forward.4} parent=11 // pred_region
        _
      $region16: #{en_conv_block_forward.4} parent=11 // pred_fallthru
        _
      // Predicated region
      $region17: #{en_conv_block_forward.4} parent=11 // pred_check
        %p166 = pneg %p80
      $region18: #{en_conv_block_forward.4} parent=11 // pred_check_branch
        %168 = sbr.rel (%p166) target = $region20
      $region19: #{en_conv_block_forward.4} parent=11 // pred_region
        _
      $region20: #{en_conv_block_forward.4} parent=11 // pred_fallthru
        _
    $region12: #{en_conv_block_forward.4} parent=5 // pred_fallthru
      _
    %p169 = scmp.lt.s32.totalorder %s12, 2
    // Predicated region
    $region21: #{en_conv_block_forward.4} parent=5 // pred_check
      %p170 = pneg %p169
    $region22: #{en_conv_block_forward.4} parent=5 // pred_check_branch
      %172 = sbr.rel (%p170) target = $region24
    $region23: #{en_conv_block_forward.4} parent=5 // pred_region
      // Predicated region
      $region25: #{en_conv_block_forward.4} parent=23 // pred_check
        %p173 = pneg %p32
      $region26: #{en_conv_block_forward.4} parent=23 // pred_check_branch
        %175 = sbr.rel (%p173) target = $region28
      $region27: #{en_conv_block_forward.4} parent=23 // pred_region
        %p176 = scmp.lt.s32.totalorder %s12, 1
        %s177 = scalar_select %p176, %s12, 1
        %s178 = smul.addr %s177, 3
        %s179 = smul.addr %s178, 4
        %s180 = scalar_lea.vmem %s0, %s179
      $region28: #{en_conv_block_forward.4} parent=23 // pred_fallthru
        _
    $region24: #{en_conv_block_forward.4} parent=5 // pred_fallthru
      _
    %p181 = scmp.le.s32.totalorder 1, %s12
    %p182 = scmp.lt.s32.totalorder %s12, 3
    %p183 = pnand %p181, %p182
    %p184 = pneg %p183
    // Predicated region
    $region29: #{en_conv_block_forward.4} parent=5 // pred_check
      _
    $region30: #{en_conv_block_forward.4} parent=5 // pred_check_branch
      %186 = sbr.rel (%p183) target = $region32
    $region31: #{en_conv_block_forward.4} parent=5 // pred_region
      %s187 = ssub.s32 %s12, 1
      %p188 = scmp.lt.s32.totalorder %s17, 1
      %s189 = scalar_select %p188, %s17, 1
      %s190 = smul.addr %s189, 3
      %s191 = smul.addr %s190, 4
      %s192 = scalar_lea.vmem %s0, %s191
      %p193 = pneg %p38
      %p194 = pneg %p35
      %p195 = pneg %p59
      %p196 = pneg %p56
      %p197 = pneg %p80
      %p198 = pneg %p77
      %p199 = pneg %p106
      %p200 = pneg %p103
      %p201 = scmp.lt.s32.totalorder %s17, 1
      %s202 = scalar_select %p201, %s17, 1
      %s203 = smul.addr %s202, 3
      %s204 = smul.addr %s203, 8
      %s205 = scalar_lea.vmem %s3, %s204
      %p206 = pneg %p127
      %p207 = pneg %p124
      %p208 = pneg %p148
      %p209 = pneg %p145
      %p210 = scmp.lt.s32.totalorder %s17, 1
      %s211 = scalar_select %p210, %s17, 1
      %s212 = smul.addr %s211, 3
      %s213 = smul.addr %s212, 4
      %s214 = scalar_lea.vmem %s0, %s213
      %p215 = scmp.lt.s32.totalorder %s17, 1
      %s216 = scalar_select %p215, %s17, 1
      %s217 = smul.addr %s216, 3
      %s218 = smul.addr %s217, 8
      %s219 = scalar_lea.vmem %s3, %s218
      %p220 = scmp.eq.s32.totalorder %s17, 0
      // Predicated region
      $region33: #{en_conv_block_forward.4} parent=31 // pred_check
        %p221 = pneg %p220
      $region34: #{en_conv_block_forward.4} parent=31 // pred_check_branch
        %223 = sbr.rel (%p221) target = $region36
      $region35: #{en_conv_block_forward.4} parent=31 // pred_region
        %vm224 = vcmask 7168
        %225 = vst.msk [vmem:[%s4] sm:$0xff] %vm224, 0.0
        %226 = vst.msk [vmem:[%s5] sm:$0xff] %vm224, 0.0
      $region36: #{en_conv_block_forward.4} parent=31 // pred_fallthru
        _
      %v227 = vld [vmem:[%s214] sm:$0xff]
      %v228 = vld [vmem:[%s214 + $0x8] sm:$0xf]
      %v229 = vld [vmem:[%s1] sm:$0xff]
      %s230 = scalar_lea.vmem %s1, 8
      %v231 = vld [vmem:[%s230] sm:$0xff]
      %234 = vst [vmem:[#allocation1] ss:$2 sm:$0xff] %v227
      %s235 = scalar_lea.vmem [#allocation1], 16
      %236 = vst [vmem:[%s235] ss:$2 sm:$0xff] %v228
      %v237 = vld.sshfl [vmem:[#allocation1] sm:$0xff pattern:$0x75316420]
      %v238 = vld.sshfl [vmem:[#allocation1 + $0x8] sm:$0xff pattern:$0x75316420]
      %v239 = vld.sshfl [vmem:[#allocation1 + $0x10] sm:$0xff pattern:$0x75316420]
      %240 = vrot.lane.b32.xlu0 %v237, 127
      %v241 = vpop.permute.xlu0 %240
      %242 = vrot.lane.b32.xlu0 %v238, 127
      %v243 = vpop.permute.xlu0 %242
      %244 = vrot.lane.b32.xlu0 %v239, 127
      %v245 = vpop.permute.xlu0 %244
      %vm246 = vcmask 1039360
      %v247 = vsel %vm246, %v241, %v243
      %v248 = vsel %vm246, %v243, %v245
      %vm249 = vcmask 31744
      %v251 = vsel %vm249, %v231, 0
      %vm253 = vcmask 1043456
      %v254 = vsel %vm253, %v247, 0
      %v256 = vsel %vm253, %v248, 0
      %v258 = vsel %vm253, %v245, 0
      %260 = vmatpush.msra.mxu0 0.0
      %261 = vmatpush.msra.mxu0 0.0
      %262 = vmatpush.msra.mxu0 0.0
      %263 = vmatpush.msra.mxu0 0.0
      %264 = vmatpush.msra.mxu0 0.0
      %265 = vmatpush.msra.mxu0 0.0
      %266 = vmatpush.msra.mxu0 0.0
      %267 = vmatpush.msra.mxu0 0.0
      %268 = vmatpush.msra.mxu0 0.0
      %269 = vmatpush.msra.mxu0 0.0
      %270 = vmatpush.msra.mxu0 0.0
      %271 = vmatpush.msra.mxu0 0.0
      %272 = vmatpush.msra.mxu0 0.0
      %273 = vmatpush.msra.mxu0 0.0
      %274 = vmatpush.msra.mxu0 0.0
      %275 = vmatpush.msra.mxu0 %v254
      %276 = vmatmul.f32.gmra.mxu0 %v251
      %v277 = vpop.f32.mrf.mxu0
      %v278 = vadd.f32 0.0, %v277
      %279 = vdwg.mxu0
      %280 = vmatpush.msra.mxu0 0.0
      %281 = vmatpush.msra.mxu0 0.0
      %282 = vmatpush.msra.mxu0 0.0
      %283 = vmatpush.msra.mxu0 0.0
      %284 = vmatpush.msra.mxu0 0.0
      %285 = vmatpush.msra.mxu0 0.0
      %286 = vmatpush.msra.mxu0 0.0
      %287 = vmatpush.msra.mxu0 0.0
      %288 = vmatpush.msra.mxu0 0.0
      %289 = vmatpush.msra.mxu0 0.0
      %290 = vmatpush.msra.mxu0 0.0
      %291 = vmatpush.msra.mxu0 0.0
      %292 = vmatpush.msra.mxu0 0.0
      %293 = vmatpush.msra.mxu0 0.0
      %294 = vmatpush.msra.mxu0 0.0
      %295 = vmatpush.msra.mxu0 %v256
      %296 = vmatmul.f32.gmra.mxu0 %v251
      %v297 = vpop.f32.mrf.mxu0
      %v298 = vadd.f32 0.0, %v297
      %299 = vdwg.mxu0
      %300 = vmatpush.msra.mxu0 0.0
      %301 = vmatpush.msra.mxu0 0.0
      %302 = vmatpush.msra.mxu0 0.0
      %303 = vmatpush.msra.mxu0 0.0
      %304 = vmatpush.msra.mxu0 0.0
      %305 = vmatpush.msra.mxu0 0.0
      %306 = vmatpush.msra.mxu0 0.0
      %307 = vmatpush.msra.mxu0 0.0
      %308 = vmatpush.msra.mxu0 0.0
      %309 = vmatpush.msra.mxu0 0.0
      %310 = vmatpush.msra.mxu0 0.0
      %311 = vmatpush.msra.mxu0 0.0
      %312 = vmatpush.msra.mxu0 0.0
      %313 = vmatpush.msra.mxu0 0.0
      %314 = vmatpush.msra.mxu0 0.0
      %315 = vmatpush.msra.mxu0 %v258
      %316 = vmatmul.f32.gmra.mxu0 %v251
      %v317 = vpop.f32.mrf.mxu0
      %v318 = vadd.f32 0.0, %v317
      %319 = vdwg.mxu0
      %320 = vst [vmem:[#allocation1] ss:$2 sm:$0xff] %v227
      %s321 = scalar_lea.vmem [#allocation1], 16
      %322 = vst [vmem:[%s321] ss:$2 sm:$0xff] %v228
      %v323 = vld.sshfl [vmem:[#allocation1] sm:$0xff pattern:$0x75316420]
      %v324 = vld.sshfl [vmem:[#allocation1 + $0x8] sm:$0xff pattern:$0x75316420]
      %v325 = vld.sshfl [vmem:[#allocation1 + $0x10] sm:$0xff pattern:$0x75316420]
      %v327 = vsel %vm249, %v229, 0
      %v329 = vsel %vm253, %v323, 0
      %v331 = vsel %vm253, %v324, 0
      %v333 = vsel %vm253, %v325, 0
      %335 = vmatpush.msra.mxu0 0.0
      %336 = vmatpush.msra.mxu0 0.0
      %337 = vmatpush.msra.mxu0 0.0
      %338 = vmatpush.msra.mxu0 0.0
      %339 = vmatpush.msra.mxu0 0.0
      %340 = vmatpush.msra.mxu0 0.0
      %341 = vmatpush.msra.mxu0 0.0
      %342 = vmatpush.msra.mxu0 0.0
      %343 = vmatpush.msra.mxu0 0.0
      %344 = vmatpush.msra.mxu0 0.0
      %345 = vmatpush.msra.mxu0 0.0
      %346 = vmatpush.msra.mxu0 0.0
      %347 = vmatpush.msra.mxu0 0.0
      %348 = vmatpush.msra.mxu0 0.0
      %349 = vmatpush.msra.mxu0 0.0
      %350 = vmatpush.msra.mxu0 %v329
      %351 = vmatmul.f32.gmra.mxu0 %v327
      %v352 = vpop.f32.mrf.mxu0
      %v353 = vadd.f32 %v278, %v352
      %354 = vdwg.mxu0
      %355 = vmatpush.msra.mxu0 0.0
      %356 = vmatpush.msra.mxu0 0.0
      %357 = vmatpush.msra.mxu0 0.0
      %358 = vmatpush.msra.mxu0 0.0
      %359 = vmatpush.msra.mxu0 0.0
      %360 = vmatpush.msra.mxu0 0.0
      %361 = vmatpush.msra.mxu0 0.0
      %362 = vmatpush.msra.mxu0 0.0
      %363 = vmatpush.msra.mxu0 0.0
      %364 = vmatpush.msra.mxu0 0.0
      %365 = vmatpush.msra.mxu0 0.0
      %366 = vmatpush.msra.mxu0 0.0
      %367 = vmatpush.msra.mxu0 0.0
      %368 = vmatpush.msra.mxu0 0.0
      %369 = vmatpush.msra.mxu0 0.0
      %370 = vmatpush.msra.mxu0 %v331
      %371 = vmatmul.f32.gmra.mxu0 %v327
      %v372 = vpop.f32.mrf.mxu0
      %v373 = vadd.f32 %v298, %v372
      %374 = vdwg.mxu0
      %375 = vmatpush.msra.mxu0 0.0
      %376 = vmatpush.msra.mxu0 0.0
      %377 = vmatpush.msra.mxu0 0.0
      %378 = vmatpush.msra.mxu0 0.0
      %379 = vmatpush.msra.mxu0 0.0
      %380 = vmatpush.msra.mxu0 0.0
      %381 = vmatpush.msra.mxu0 0.0
      %382 = vmatpush.msra.mxu0 0.0
      %383 = vmatpush.msra.mxu0 0.0
      %384 = vmatpush.msra.mxu0 0.0
      %385 = vmatpush.msra.mxu0 0.0
      %386 = vmatpush.msra.mxu0 0.0
      %387 = vmatpush.msra.mxu0 0.0
      %388 = vmatpush.msra.mxu0 0.0
      %389 = vmatpush.msra.mxu0 0.0
      %390 = vmatpush.msra.mxu0 %v333
      %391 = vmatmul.f32.gmra.mxu0 %v327
      %v392 = vpop.f32.mrf.mxu0
      %v393 = vadd.f32 %v318, %v392
      %394 = vdwg.mxu0
      %s395 = scalar_lea.vmem %s1, 16
      %v396 = vld [vmem:[%s395] sm:$0xff]
      %397 = vst [vmem:[#allocation1] ss:$2 sm:$0xff] %v227
      %s398 = scalar_lea.vmem [#allocation1], 16
      %399 = vst [vmem:[%s398] ss:$2 sm:$0xff] %v228
      %v400 = vld.sshfl [vmem:[#allocation1] sm:$0xff pattern:$0x75316420]
      %v401 = vld.sshfl [vmem:[#allocation1 + $0x8] sm:$0xff pattern:$0x75316420]
      %v402 = vld.sshfl [vmem:[#allocation1 + $0x10] sm:$0xff pattern:$0x75316420]
      %403 = vrot.lane.b32.xlu0 %v400, 126
      %v404 = vpop.permute.xlu0 %403
      %405 = vrot.lane.b32.xlu0 %v401, 126
      %v406 = vpop.permute.xlu0 %405
      %407 = vrot.lane.b32.xlu0 %v402, 126
      %v408 = vpop.permute.xlu0 %407
      %vm409 = vcmask 1031168
      %v410 = vsel %vm409, %v404, %v406
      %v411 = vsel %vm409, %v406, %v408
      %v413 = vsel %vm249, %v396, 0
      %v415 = vsel %vm253, %v410, 0
      %v417 = vsel %vm253, %v411, 0
      %v419 = vsel %vm253, %v408, 0
      %421 = vmatpush.msra.mxu0 0.0
      %422 = vmatpush.msra.mxu0 0.0
      %423 = vmatpush.msra.mxu0 0.0
      %424 = vmatpush.msra.mxu0 0.0
      %425 = vmatpush.msra.mxu0 0.0
      %426 = vmatpush.msra.mxu0 0.0
      %427 = vmatpush.msra.mxu0 0.0
      %428 = vmatpush.msra.mxu0 0.0
      %429 = vmatpush.msra.mxu0 0.0
      %430 = vmatpush.msra.mxu0 0.0
      %431 = vmatpush.msra.mxu0 0.0
      %432 = vmatpush.msra.mxu0 0.0
      %433 = vmatpush.msra.mxu0 0.0
      %434 = vmatpush.msra.mxu0 0.0
      %435 = vmatpush.msra.mxu0 0.0
      %436 = vmatpush.msra.mxu0 %v415
      %437 = vmatmul.f32.gmra.mxu0 %v413
      %v438 = vpop.f32.mrf.mxu0
      %v439 = vadd.f32 0.0, %v438
      %440 = vdwg.mxu0
      %441 = vmatpush.msra.mxu0 0.0
      %442 = vmatpush.msra.mxu0 0.0
      %443 = vmatpush.msra.mxu0 0.0
      %444 = vmatpush.msra.mxu0 0.0
      %445 = vmatpush.msra.mxu0 0.0
      %446 = vmatpush.msra.mxu0 0.0
      %447 = vmatpush.msra.mxu0 0.0
      %448 = vmatpush.msra.mxu0 0.0
      %449 = vmatpush.msra.mxu0 0.0
      %450 = vmatpush.msra.mxu0 0.0
      %451 = vmatpush.msra.mxu0 0.0
      %452 = vmatpush.msra.mxu0 0.0
      %453 = vmatpush.msra.mxu0 0.0
      %454 = vmatpush.msra.mxu0 0.0
      %455 = vmatpush.msra.mxu0 0.0
      %456 = vmatpush.msra.mxu0 %v417
      %457 = vmatmul.f32.gmra.mxu0 %v413
      %v458 = vpop.f32.mrf.mxu0
      %v459 = vadd.f32 0.0, %v458
      %460 = vdwg.mxu0
      %461 = vmatpush.msra.mxu0 0.0
      %462 = vmatpush.msra.mxu0 0.0
      %463 = vmatpush.msra.mxu0 0.0
      %464 = vmatpush.msra.mxu0 0.0
      %465 = vmatpush.msra.mxu0 0.0
      %466 = vmatpush.msra.mxu0 0.0
      %467 = vmatpush.msra.mxu0 0.0
      %468 = vmatpush.msra.mxu0 0.0
      %469 = vmatpush.msra.mxu0 0.0
      %470 = vmatpush.msra.mxu0 0.0
      %471 = vmatpush.msra.mxu0 0.0
      %472 = vmatpush.msra.mxu0 0.0
      %473 = vmatpush.msra.mxu0 0.0
      %474 = vmatpush.msra.mxu0 0.0
      %475 = vmatpush.msra.mxu0 0.0
      %476 = vmatpush.msra.mxu0 %v419
      %477 = vmatmul.f32.gmra.mxu0 %v413
      %v478 = vpop.f32.mrf.mxu0
      %v479 = vadd.f32 0.0, %v478
      %480 = vdwg.mxu0
      %v481 = vadd.f32 %v353, %v439
      %v482 = vadd.f32 %v373, %v459
      %v483 = vadd.f32 %v393, %v479
      %s484 = scalar_lea.vmem %s1, 24
      %v485 = vld [vmem:[%s484] sm:$0xff]
      %486 = vst [vmem:[#allocation1] ss:$2 sm:$0xff] %v227
      %s487 = scalar_lea.vmem [#allocation1], 16
      %488 = vst [vmem:[%s487] ss:$2 sm:$0xff] %v228
      %v489 = vld.sshfl [vmem:[#allocation1] sm:$0xff pattern:$0x75316420]
      %v490 = vld.sshfl [vmem:[#allocation1 + $0x8] sm:$0xff pattern:$0x75316420]
      %v491 = vld.sshfl [vmem:[#allocation1 + $0x10] sm:$0xff pattern:$0x75316420]
      %492 = vrot.lane.b32.xlu0 %v489, 110
      %v493 = vpop.permute.xlu0 %492
      %494 = vrot.lane.b32.xlu0 %v490, 110
      %v495 = vpop.permute.xlu0 %494
      %496 = vrot.lane.b32.xlu0 %v491, 110
      %v497 = vpop.permute.xlu0 %496
      %vm498 = vcmask 900096
      %v499 = vsel %vm498, %v493, %v495
      %v500 = vsel %vm498, %v495, %v497
      %v502 = vsel %vm249, %v485, 0
      %v504 = vsel %vm253, %v499, 0
      %v506 = vsel %vm253, %v500, 0
      %v508 = vsel %vm253, %v497, 0
      %510 = vmatpush.msra.mxu0 0.0
      %511 = vmatpush.msra.mxu0 0.0
      %512 = vmatpush.msra.mxu0 0.0
      %513 = vmatpush.msra.mxu0 0.0
      %514 = vmatpush.msra.mxu0 0.0
      %515 = vmatpush.msra.mxu0 0.0
      %516 = vmatpush.msra.mxu0 0.0
      %517 = vmatpush.msra.mxu0 0.0
      %518 = vmatpush.msra.mxu0 0.0
      %519 = vmatpush.msra.mxu0 0.0
      %520 = vmatpush.msra.mxu0 0.0
      %521 = vmatpush.msra.mxu0 0.0
      %522 = vmatpush.msra.mxu0 0.0
      %523 = vmatpush.msra.mxu0 0.0
      %524 = vmatpush.msra.mxu0 0.0
      %525 = vmatpush.msra.mxu0 %v504
      %526 = vmatmul.f32.gmra.mxu0 %v502
      %v527 = vpop.f32.mrf.mxu0
      %v528 = vadd.f32 0.0, %v527
      %529 = vdwg.mxu0
      %530 = vmatpush.msra.mxu0 0.0
      %531 = vmatpush.msra.mxu0 0.0
      %532 = vmatpush.msra.mxu0 0.0
      %533 = vmatpush.msra.mxu0 0.0
      %534 = vmatpush.msra.mxu0 0.0
      %535 = vmatpush.msra.mxu0 0.0
      %536 = vmatpush.msra.mxu0 0.0
      %537 = vmatpush.msra.mxu0 0.0
      %538 = vmatpush.msra.mxu0 0.0
      %539 = vmatpush.msra.mxu0 0.0
      %540 = vmatpush.msra.mxu0 0.0
      %541 = vmatpush.msra.mxu0 0.0
      %542 = vmatpush.msra.mxu0 0.0
      %543 = vmatpush.msra.mxu0 0.0
      %544 = vmatpush.msra.mxu0 0.0
      %545 = vmatpush.msra.mxu0 %v506
      %546 = vmatmul.f32.gmra.mxu0 %v502
      %v547 = vpop.f32.mrf.mxu0
      %v548 = vadd.f32 0.0, %v547
      %549 = vdwg.mxu0
      %550 = vmatpush.msra.mxu0 0.0
      %551 = vmatpush.msra.mxu0 0.0
      %552 = vmatpush.msra.mxu0 0.0
      %553 = vmatpush.msra.mxu0 0.0
      %554 = vmatpush.msra.mxu0 0.0
      %555 = vmatpush.msra.mxu0 0.0
      %556 = vmatpush.msra.mxu0 0.0
      %557 = vmatpush.msra.mxu0 0.0
      %558 = vmatpush.msra.mxu0 0.0
      %559 = vmatpush.msra.mxu0 0.0
      %560 = vmatpush.msra.mxu0 0.0
      %561 = vmatpush.msra.mxu0 0.0
      %562 = vmatpush.msra.mxu0 0.0
      %563 = vmatpush.msra.mxu0 0.0
      %564 = vmatpush.msra.mxu0 0.0
      %565 = vmatpush.msra.mxu0 %v508
      %566 = vmatmul.f32.gmra.mxu0 %v502
      %v567 = vpop.f32.mrf.mxu0
      %v568 = vadd.f32 0.0, %v567
      %569 = vdwg.mxu0
      %v570 = vadd.f32 %v481, %v528
      %v571 = vadd.f32 %v482, %v548
      %v572 = vadd.f32 %v483, %v568
      %s573 = scalar_lea.vmem %s1, 32
      %v574 = vld [vmem:[%s573] sm:$0xff]
      %575 = vst [vmem:[#allocation1] ss:$2 sm:$0xff] %v227
      %s576 = scalar_lea.vmem [#allocation1], 16
      %577 = vst [vmem:[%s576] ss:$2 sm:$0xff] %v228
      %v578 = vld.sshfl [vmem:[#allocation1] sm:$0xff pattern:$0x75316420]
      %v579 = vld.sshfl [vmem:[#allocation1 + $0x8] sm:$0xff pattern:$0x75316420]
      %v580 = vld.sshfl [vmem:[#allocation1 + $0x10] sm:$0xff pattern:$0x75316420]
      %581 = vrot.lane.b32.xlu0 %v578, 109
      %v582 = vpop.permute.xlu0 %581
      %583 = vrot.lane.b32.xlu0 %v579, 109
      %v584 = vpop.permute.xlu0 %583
      %585 = vrot.lane.b32.xlu0 %v580, 109
      %v586 = vpop.permute.xlu0 %585
      %vm587 = vcmask 891904
      %v588 = vsel %vm587, %v582, %v584
      %v589 = vsel %vm587, %v584, %v586
      %v591 = vsel %vm249, %v574, 0
      %v593 = vsel %vm253, %v588, 0
      %v595 = vsel %vm253, %v589, 0
      %v597 = vsel %vm253, %v586, 0
      %599 = vmatpush.msra.mxu0 0.0
      %600 = vmatpush.msra.mxu0 0.0
      %601 = vmatpush.msra.mxu0 0.0
      %602 = vmatpush.msra.mxu0 0.0
      %603 = vmatpush.msra.mxu0 0.0
      %604 = vmatpush.msra.mxu0 0.0
      %605 = vmatpush.msra.mxu0 0.0
      %606 = vmatpush.msra.mxu0 0.0
      %607 = vmatpush.msra.mxu0 0.0
      %608 = vmatpush.msra.mxu0 0.0
      %609 = vmatpush.msra.mxu0 0.0
      %610 = vmatpush.msra.mxu0 0.0
      %611 = vmatpush.msra.mxu0 0.0
      %612 = vmatpush.msra.mxu0 0.0
      %613 = vmatpush.msra.mxu0 0.0
      %614 = vmatpush.msra.mxu0 %v593
      %615 = vmatmul.f32.gmra.mxu0 %v591
      %v616 = vpop.f32.mrf.mxu0
      %v617 = vadd.f32 0.0, %v616
      %618 = vdwg.mxu0
      %619 = vmatpush.msra.mxu0 0.0
      %620 = vmatpush.msra.mxu0 0.0
      %621 = vmatpush.msra.mxu0 0.0
      %622 = vmatpush.msra.mxu0 0.0
      %623 = vmatpush.msra.mxu0 0.0
      %624 = vmatpush.msra.mxu0 0.0
      %625 = vmatpush.msra.mxu0 0.0
      %626 = vmatpush.msra.mxu0 0.0
      %627 = vmatpush.msra.mxu0 0.0
      %628 = vmatpush.msra.mxu0 0.0
      %629 = vmatpush.msra.mxu0 0.0
      %630 = vmatpush.msra.mxu0 0.0
      %631 = vmatpush.msra.mxu0 0.0
      %632 = vmatpush.msra.mxu0 0.0
      %633 = vmatpush.msra.mxu0 0.0
      %634 = vmatpush.msra.mxu0 %v595
      %635 = vmatmul.f32.gmra.mxu0 %v591
      %v636 = vpop.f32.mrf.mxu0
      %v637 = vadd.f32 0.0, %v636
      %638 = vdwg.mxu0
      %639 = vmatpush.msra.mxu0 0.0
      %640 = vmatpush.msra.mxu0 0.0
      %641 = vmatpush.msra.mxu0 0.0
      %642 = vmatpush.msra.mxu0 0.0
      %643 = vmatpush.msra.mxu0 0.0
      %644 = vmatpush.msra.mxu0 0.0
      %645 = vmatpush.msra.mxu0 0.0
      %646 = vmatpush.msra.mxu0 0.0
      %647 = vmatpush.msra.mxu0 0.0
      %648 = vmatpush.msra.mxu0 0.0
      %649 = vmatpush.msra.mxu0 0.0
      %650 = vmatpush.msra.mxu0 0.0
      %651 = vmatpush.msra.mxu0 0.0
      %652 = vmatpush.msra.mxu0 0.0
      %653 = vmatpush.msra.mxu0 0.0
      %654 = vmatpush.msra.mxu0 %v597
      %655 = vmatmul.f32.gmra.mxu0 %v591
      %v656 = vpop.f32.mrf.mxu0
      %v657 = vadd.f32 0.0, %v656
      %658 = vdwg.mxu0
      %v659 = vadd.f32 %v570, %v617
      %v660 = vadd.f32 %v571, %v637
      %v661 = vadd.f32 %v572, %v657
      %s662 = scalar_lea.vmem %s1, 40
      %v663 = vld [vmem:[%s662] sm:$0xff]
      %664 = vst [vmem:[#allocation1] ss:$2 sm:$0xff] %v227
      %s665 = scalar_lea.vmem [#allocation1], 16
      %666 = vst [vmem:[%s665] ss:$2 sm:$0xff] %v228
      %v667 = vld.sshfl [vmem:[#allocation1] sm:$0xff pattern:$0x75316420]
      %v668 = vld.sshfl [vmem:[#allocation1 + $0x8] sm:$0xff pattern:$0x75316420]
      %v669 = vld.sshfl [vmem:[#allocation1 + $0x10] sm:$0xff pattern:$0x75316420]
      %670 = vrot.lane.b32.xlu0 %v667, 108
      %v671 = vpop.permute.xlu0 %670
      %672 = vrot.lane.b32.xlu0 %v668, 108
      %v673 = vpop.permute.xlu0 %672
      %674 = vrot.lane.b32.xlu0 %v669, 108
      %v675 = vpop.permute.xlu0 %674
      %vm676 = vcmask 883712
      %v677 = vsel %vm676, %v671, %v673
      %v678 = vsel %vm676, %v673, %v675
      %v680 = vsel %vm249, %v663, 0
      %v682 = vsel %vm253, %v677, 0
      %v684 = vsel %vm253, %v678, 0
      %v686 = vsel %vm253, %v675, 0
      %688 = vmatpush.msra.mxu0 0.0
      %689 = vmatpush.msra.mxu0 0.0
      %690 = vmatpush.msra.mxu0 0.0
      %691 = vmatpush.msra.mxu0 0.0
      %692 = vmatpush.msra.mxu0 0.0
      %693 = vmatpush.msra.mxu0 0.0
      %694 = vmatpush.msra.mxu0 0.0
      %695 = vmatpush.msra.mxu0 0.0
      %696 = vmatpush.msra.mxu0 0.0
      %697 = vmatpush.msra.mxu0 0.0
      %698 = vmatpush.msra.mxu0 0.0
      %699 = vmatpush.msra.mxu0 0.0
      %700 = vmatpush.msra.mxu0 0.0
      %701 = vmatpush.msra.mxu0 0.0
      %702 = vmatpush.msra.mxu0 0.0
      %703 = vmatpush.msra.mxu0 %v682
      %704 = vmatmul.f32.gmra.mxu0 %v680
      %v705 = vpop.f32.mrf.mxu0
      %v706 = vadd.f32 0.0, %v705
      %707 = vdwg.mxu0
      %708 = vmatpush.msra.mxu0 0.0
      %709 = vmatpush.msra.mxu0 0.0
      %710 = vmatpush.msra.mxu0 0.0
      %711 = vmatpush.msra.mxu0 0.0
      %712 = vmatpush.msra.mxu0 0.0
      %713 = vmatpush.msra.mxu0 0.0
      %714 = vmatpush.msra.mxu0 0.0
      %715 = vmatpush.msra.mxu0 0.0
      %716 = vmatpush.msra.mxu0 0.0
      %717 = vmatpush.msra.mxu0 0.0
      %718 = vmatpush.msra.mxu0 0.0
      %719 = vmatpush.msra.mxu0 0.0
      %720 = vmatpush.msra.mxu0 0.0
      %721 = vmatpush.msra.mxu0 0.0
      %722 = vmatpush.msra.mxu0 0.0
      %723 = vmatpush.msra.mxu0 %v684
      %724 = vmatmul.f32.gmra.mxu0 %v680
      %v725 = vpop.f32.mrf.mxu0
      %v726 = vadd.f32 0.0, %v725
      %727 = vdwg.mxu0
      %728 = vmatpush.msra.mxu0 0.0
      %729 = vmatpush.msra.mxu0 0.0
      %730 = vmatpush.msra.mxu0 0.0
      %731 = vmatpush.msra.mxu0 0.0
      %732 = vmatpush.msra.mxu0 0.0
      %733 = vmatpush.msra.mxu0 0.0
      %734 = vmatpush.msra.mxu0 0.0
      %735 = vmatpush.msra.mxu0 0.0
      %736 = vmatpush.msra.mxu0 0.0
      %737 = vmatpush.msra.mxu0 0.0
      %738 = vmatpush.msra.mxu0 0.0
      %739 = vmatpush.msra.mxu0 0.0
      %740 = vmatpush.msra.mxu0 0.0
      %741 = vmatpush.msra.mxu0 0.0
      %742 = vmatpush.msra.mxu0 0.0
      %743 = vmatpush.msra.mxu0 %v686
      %744 = vmatmul.f32.gmra.mxu0 %v680
      %v745 = vpop.f32.mrf.mxu0
      %v746 = vadd.f32 0.0, %v745
      %747 = vdwg.mxu0
      %v748 = vadd.f32 %v659, %v706
      %v749 = vadd.f32 %v660, %v726
      %v750 = vadd.f32 %v661, %v746
      %s751 = scalar_lea.vmem %s1, 48
      %v752 = vld [vmem:[%s751] sm:$0xff]
      %753 = vst [vmem:[#allocation1] ss:$2 sm:$0xff] %v227
      %s754 = scalar_lea.vmem [#allocation1], 16
      %755 = vst [vmem:[%s754] ss:$2 sm:$0xff] %v228
      %v756 = vld.sshfl [vmem:[#allocation1] sm:$0xff pattern:$0x75316420]
      %v757 = vld.sshfl [vmem:[#allocation1 + $0x8] sm:$0xff pattern:$0x75316420]
      %v758 = vld.sshfl [vmem:[#allocation1 + $0x10] sm:$0xff pattern:$0x75316420]
      %759 = vrot.lane.b32.xlu0 %v756, 92
      %v760 = vpop.permute.xlu0 %759
      %761 = vrot.lane.b32.xlu0 %v757, 92
      %v762 = vpop.permute.xlu0 %761
      %763 = vrot.lane.b32.xlu0 %v758, 92
      %v764 = vpop.permute.xlu0 %763
      %vm765 = vcmask 752640
      %v766 = vsel %vm765, %v760, %v762
      %v767 = vsel %vm765, %v762, %v764
      %v769 = vsel %vm249, %v752, 0
      %v771 = vsel %vm253, %v766, 0
      %v773 = vsel %vm253, %v767, 0
      %v775 = vsel %vm253, %v764, 0
      %777 = vmatpush.msra.mxu0 0.0
      %778 = vmatpush.msra.mxu0 0.0
      %779 = vmatpush.msra.mxu0 0.0
      %780 = vmatpush.msra.mxu0 0.0
      %781 = vmatpush.msra.mxu0 0.0
      %782 = vmatpush.msra.mxu0 0.0
      %783 = vmatpush.msra.mxu0 0.0
      %784 = vmatpush.msra.mxu0 0.0
      %785 = vmatpush.msra.mxu0 0.0
      %786 = vmatpush.msra.mxu0 0.0
      %787 = vmatpush.msra.mxu0 0.0
      %788 = vmatpush.msra.mxu0 0.0
      %789 = vmatpush.msra.mxu0 0.0
      %790 = vmatpush.msra.mxu0 0.0
      %791 = vmatpush.msra.mxu0 0.0
      %792 = vmatpush.msra.mxu0 %v771
      %793 = vmatmul.f32.gmra.mxu0 %v769
      %v794 = vpop.f32.mrf.mxu0
      %v795 = vadd.f32 0.0, %v794
      %796 = vdwg.mxu0
      %797 = vmatpush.msra.mxu0 0.0
      %798 = vmatpush.msra.mxu0 0.0
      %799 = vmatpush.msra.mxu0 0.0
      %800 = vmatpush.msra.mxu0 0.0
      %801 = vmatpush.msra.mxu0 0.0
      %802 = vmatpush.msra.mxu0 0.0
      %803 = vmatpush.msra.mxu0 0.0
      %804 = vmatpush.msra.mxu0 0.0
      %805 = vmatpush.msra.mxu0 0.0
      %806 = vmatpush.msra.mxu0 0.0
      %807 = vmatpush.msra.mxu0 0.0
      %808 = vmatpush.msra.mxu0 0.0
      %809 = vmatpush.msra.mxu0 0.0
      %810 = vmatpush.msra.mxu0 0.0
      %811 = vmatpush.msra.mxu0 0.0
      %812 = vmatpush.msra.mxu0 %v773
      %813 = vmatmul.f32.gmra.mxu0 %v769
      %v814 = vpop.f32.mrf.mxu0
      %v815 = vadd.f32 0.0, %v814
      %816 = vdwg.mxu0
      %817 = vmatpush.msra.mxu0 0.0
      %818 = vmatpush.msra.mxu0 0.0
      %819 = vmatpush.msra.mxu0 0.0
      %820 = vmatpush.msra.mxu0 0.0
      %821 = vmatpush.msra.mxu0 0.0
      %822 = vmatpush.msra.mxu0 0.0
      %823 = vmatpush.msra.mxu0 0.0
      %824 = vmatpush.msra.mxu0 0.0
      %825 = vmatpush.msra.mxu0 0.0
      %826 = vmatpush.msra.mxu0 0.0
      %827 = vmatpush.msra.mxu0 0.0
      %828 = vmatpush.msra.mxu0 0.0
      %829 = vmatpush.msra.mxu0 0.0
      %830 = vmatpush.msra.mxu0 0.0
      %831 = vmatpush.msra.mxu0 0.0
      %832 = vmatpush.msra.mxu0 %v775
      %833 = vmatmul.f32.gmra.mxu0 %v769
      %v834 = vpop.f32.mrf.mxu0
      %v835 = vadd.f32 0.0, %v834
      %836 = vdwg.mxu0
      %v837 = vadd.f32 %v748, %v795
      %v838 = vadd.f32 %v749, %v815
      %v839 = vadd.f32 %v750, %v835
      %s840 = scalar_lea.vmem %s1, 56
      %v841 = vld [vmem:[%s840] sm:$0xff]
      %842 = vst [vmem:[#allocation1] ss:$2 sm:$0xff] %v227
      %s843 = scalar_lea.vmem [#allocation1], 16
      %844 = vst [vmem:[%s843] ss:$2 sm:$0xff] %v228
      %v845 = vld.sshfl [vmem:[#allocation1] sm:$0xff pattern:$0x75316420]
      %v846 = vld.sshfl [vmem:[#allocation1 + $0x8] sm:$0xff pattern:$0x75316420]
      %v847 = vld.sshfl [vmem:[#allocation1 + $0x10] sm:$0xff pattern:$0x75316420]
      %848 = vrot.lane.b32.xlu0 %v845, 91
      %v849 = vpop.permute.xlu0 %848
      %850 = vrot.lane.b32.xlu0 %v846, 91
      %v851 = vpop.permute.xlu0 %850
      %852 = vrot.lane.b32.xlu0 %v847, 91
      %v853 = vpop.permute.xlu0 %852
      %vm854 = vcmask 744448
      %v855 = vsel %vm854, %v849, %v851
      %v856 = vsel %vm854, %v851, %v853
      %v858 = vsel %vm249, %v841, 0
      %v860 = vsel %vm253, %v855, 0
      %v862 = vsel %vm253, %v856, 0
      %v864 = vsel %vm253, %v853, 0
      %866 = vmatpush.msra.mxu0 0.0
      %867 = vmatpush.msra.mxu0 0.0
      %868 = vmatpush.msra.mxu0 0.0
      %869 = vmatpush.msra.mxu0 0.0
      %870 = vmatpush.msra.mxu0 0.0
      %871 = vmatpush.msra.mxu0 0.0
      %872 = vmatpush.msra.mxu0 0.0
      %873 = vmatpush.msra.mxu0 0.0
      %874 = vmatpush.msra.mxu0 0.0
      %875 = vmatpush.msra.mxu0 0.0
      %876 = vmatpush.msra.mxu0 0.0
      %877 = vmatpush.msra.mxu0 0.0
      %878 = vmatpush.msra.mxu0 0.0
      %879 = vmatpush.msra.mxu0 0.0
      %880 = vmatpush.msra.mxu0 0.0
      %881 = vmatpush.msra.mxu0 %v860
      %882 = vmatmul.f32.gmra.mxu0 %v858
      %v883 = vpop.f32.mrf.mxu0
      %v884 = vadd.f32 0.0, %v883
      %885 = vdwg.mxu0
      %886 = vmatpush.msra.mxu0 0.0
      %887 = vmatpush.msra.mxu0 0.0
      %888 = vmatpush.msra.mxu0 0.0
      %889 = vmatpush.msra.mxu0 0.0
      %890 = vmatpush.msra.mxu0 0.0
      %891 = vmatpush.msra.mxu0 0.0
      %892 = vmatpush.msra.mxu0 0.0
      %893 = vmatpush.msra.mxu0 0.0
      %894 = vmatpush.msra.mxu0 0.0
      %895 = vmatpush.msra.mxu0 0.0
      %896 = vmatpush.msra.mxu0 0.0
      %897 = vmatpush.msra.mxu0 0.0
      %898 = vmatpush.msra.mxu0 0.0
      %899 = vmatpush.msra.mxu0 0.0
      %900 = vmatpush.msra.mxu0 0.0
      %901 = vmatpush.msra.mxu0 %v862
      %902 = vmatmul.f32.gmra.mxu0 %v858
      %v903 = vpop.f32.mrf.mxu0
      %v904 = vadd.f32 0.0, %v903
      %905 = vdwg.mxu0
      %906 = vmatpush.msra.mxu0 0.0
      %907 = vmatpush.msra.mxu0 0.0
      %908 = vmatpush.msra.mxu0 0.0
      %909 = vmatpush.msra.mxu0 0.0
      %910 = vmatpush.msra.mxu0 0.0
      %911 = vmatpush.msra.mxu0 0.0
      %912 = vmatpush.msra.mxu0 0.0
      %913 = vmatpush.msra.mxu0 0.0
      %914 = vmatpush.msra.mxu0 0.0
      %915 = vmatpush.msra.mxu0 0.0
      %916 = vmatpush.msra.mxu0 0.0
      %917 = vmatpush.msra.mxu0 0.0
      %918 = vmatpush.msra.mxu0 0.0
      %919 = vmatpush.msra.mxu0 0.0
      %920 = vmatpush.msra.mxu0 0.0
      %921 = vmatpush.msra.mxu0 %v864
      %922 = vmatmul.f32.gmra.mxu0 %v858
      %v923 = vpop.f32.mrf.mxu0
      %v924 = vadd.f32 0.0, %v923
      %925 = vdwg.mxu0
      %v926 = vadd.f32 %v837, %v884
      %v927 = vadd.f32 %v838, %v904
      %v928 = vadd.f32 %v839, %v924
      %s929 = scalar_lea.vmem %s1, 64
      %v930 = vld [vmem:[%s929] sm:$0xff]
      %931 = vst [vmem:[#allocation1] ss:$2 sm:$0xff] %v227
      %s932 = scalar_lea.vmem [#allocation1], 16
      %933 = vst [vmem:[%s932] ss:$2 sm:$0xff] %v228
      %v934 = vld.sshfl [vmem:[#allocation1] sm:$0xff pattern:$0x75316420]
      %v935 = vld.sshfl [vmem:[#allocation1 + $0x8] sm:$0xff pattern:$0x75316420]
      %v936 = vld.sshfl [vmem:[#allocation1 + $0x10] sm:$0xff pattern:$0x75316420]
      %937 = vrot.lane.b32.xlu0 %v934, 90
      %v938 = vpop.permute.xlu0 %937
      %939 = vrot.lane.b32.xlu0 %v935, 90
      %v940 = vpop.permute.xlu0 %939
      %941 = vrot.lane.b32.xlu0 %v936, 90
      %v942 = vpop.permute.xlu0 %941
      %vm943 = vcmask 736256
      %v944 = vsel %vm943, %v938, %v940
      %v945 = vsel %vm943, %v940, %v942
      %v947 = vsel %vm249, %v930, 0
      %v949 = vsel %vm253, %v944, 0
      %v951 = vsel %vm253, %v945, 0
      %v953 = vsel %vm253, %v942, 0
      %955 = vmatpush.msra.mxu0 0.0
      %956 = vmatpush.msra.mxu0 0.0
      %957 = vmatpush.msra.mxu0 0.0
      %958 = vmatpush.msra.mxu0 0.0
      %959 = vmatpush.msra.mxu0 0.0
      %960 = vmatpush.msra.mxu0 0.0
      %961 = vmatpush.msra.mxu0 0.0
      %962 = vmatpush.msra.mxu0 0.0
      %963 = vmatpush.msra.mxu0 0.0
      %964 = vmatpush.msra.mxu0 0.0
      %965 = vmatpush.msra.mxu0 0.0
      %966 = vmatpush.msra.mxu0 0.0
      %967 = vmatpush.msra.mxu0 0.0
      %968 = vmatpush.msra.mxu0 0.0
      %969 = vmatpush.msra.mxu0 0.0
      %970 = vmatpush.msra.mxu0 %v949
      %971 = vmatmul.f32.gmra.mxu0 %v947
      %v972 = vpop.f32.mrf.mxu0
      %v973 = vadd.f32 0.0, %v972
      %974 = vdwg.mxu0
      %975 = vmatpush.msra.mxu0 0.0
      %976 = vmatpush.msra.mxu0 0.0
      %977 = vmatpush.msra.mxu0 0.0
      %978 = vmatpush.msra.mxu0 0.0
      %979 = vmatpush.msra.mxu0 0.0
      %980 = vmatpush.msra.mxu0 0.0
      %981 = vmatpush.msra.mxu0 0.0
      %982 = vmatpush.msra.mxu0 0.0
      %983 = vmatpush.msra.mxu0 0.0
      %984 = vmatpush.msra.mxu0 0.0
      %985 = vmatpush.msra.mxu0 0.0
      %986 = vmatpush.msra.mxu0 0.0
      %987 = vmatpush.msra.mxu0 0.0
      %988 = vmatpush.msra.mxu0 0.0
      %989 = vmatpush.msra.mxu0 0.0
      %990 = vmatpush.msra.mxu0 %v951
      %991 = vmatmul.f32.gmra.mxu0 %v947
      %v992 = vpop.f32.mrf.mxu0
      %v993 = vadd.f32 0.0, %v992
      %994 = vdwg.mxu0
      %995 = vmatpush.msra.mxu0 0.0
      %996 = vmatpush.msra.mxu0 0.0
      %997 = vmatpush.msra.mxu0 0.0
      %998 = vmatpush.msra.mxu0 0.0
      %999 = vmatpush.msra.mxu0 0.0
      %1000 = vmatpush.msra.mxu0 0.0
      %1001 = vmatpush.msra.mxu0 0.0
      %1002 = vmatpush.msra.mxu0 0.0
      %1003 = vmatpush.msra.mxu0 0.0
      %1004 = vmatpush.msra.mxu0 0.0
      %1005 = vmatpush.msra.mxu0 0.0
      %1006 = vmatpush.msra.mxu0 0.0
      %1007 = vmatpush.msra.mxu0 0.0
      %1008 = vmatpush.msra.mxu0 0.0
      %1009 = vmatpush.msra.mxu0 0.0
      %1010 = vmatpush.msra.mxu0 %v953
      %1011 = vmatmul.f32.gmra.mxu0 %v947
      %v1012 = vpop.f32.mrf.mxu0
      %v1013 = vadd.f32 0.0, %v1012
      %1014 = vdwg.mxu0
      %v1015 = vadd.f32 %v926, %v973
      %v1016 = vadd.f32 %v927, %v993
      %v1017 = vadd.f32 %v928, %v1013
      %1018 = vst [vmem:[%s219] sm:$0xff] %v1015
      %1019 = vst [vmem:[%s219 + $0x8] sm:$0xff] %v1016
      %vm1020 = vcmask 244736
      %1021 = vst.msk [vmem:[%s219 + $0x10] sm:$0xff] %vm1020, %v1017
      %v1022 = vld [vmem:[%s2] sm:$0x7]
      %v1024 = vperm.slane %v1022, 0
      %v1025 = vperm.slane %v1022, 1
      %v1026 = vperm.slane %v1022, 2
      %v1030 = vmul.f32 %v1015, %v1024
      %v1031 = vmul.f32 %v1016, %v1025
      %v1032 = vmul.f32 %v1017, %v1026
      %v1033 = vld [vmem:[%s4] sm:$0xff]
      %v1034 = vadd.f32 %v1030, %v1031
      %v1035 = vsel %vm1020, %v1032, 0.0
      %v1036 = vadd.f32 %v1034, %v1035
      %1037 = vadd.xlane.f32.xlu0 %v1036
      %v1038 = vpop.xlane.xlu0 %1037
      %v1039 = vadd.f32 %v1033, %v1038
      %vm1040 = vcmask 7168
      %1041 = vst.msk [vmem:[%s4] sm:$0xff] %vm1040, %v1039
      %v1042 = vld [vmem:[%s5] sm:$0xff]
      %v1043 = vmul.f32 %v1030, %v1030
      %v1044 = vmul.f32 %v1031, %v1031
      %v1045 = vmul.f32 %v1032, %v1032
      %v1046 = vadd.f32 %v1043, %v1044
      %v1047 = vsel %vm1020, %v1045, 0.0
      %v1048 = vadd.f32 %v1046, %v1047
      %1049 = vadd.xlane.f32.xlu0 %v1048
      %v1050 = vpop.xlane.xlu0 %1049
      %v1051 = vadd.f32 %v1042, %v1050
      %1052 = vst.msk [vmem:[%s5] sm:$0xff] %vm1040, %v1051
      %p1053 = scmp.lt.s32.totalorder %s17, 1
      %s1054 = scalar_select %p1053, %s17, 1
      %s1055 = smul.addr %s1054, 3
      %s1056 = smul.addr %s1055, 8
      %s1057 = scalar_lea.vmem %s3, %s1056
      // Predicated region
      $region37: #{en_conv_block_forward.4} parent=31 // pred_check
        %p1058 = pneg %p103
      $region38: #{en_conv_block_forward.4} parent=31 // pred_check_branch
        %1060 = sbr.rel (%p1058) target = $region40
      $region39: #{en_conv_block_forward.4} parent=31 // pred_region
        _
      $region40: #{en_conv_block_forward.4} parent=31 // pred_fallthru
        _
      // Predicated region
      $region41: #{en_conv_block_forward.4} parent=31 // pred_check
        %p1061 = pneg %p124
      $region42: #{en_conv_block_forward.4} parent=31 // pred_check_branch
        %1063 = sbr.rel (%p1061) target = $region44
      $region43: #{en_conv_block_forward.4} parent=31 // pred_region
        _
      $region44: #{en_conv_block_forward.4} parent=31 // pred_fallthru
        _
      // Predicated region
      $region45: #{en_conv_block_forward.4} parent=31 // pred_check
        %p1064 = pneg %p145
      $region46: #{en_conv_block_forward.4} parent=31 // pred_check_branch
        %1066 = sbr.rel (%p1064) target = $region48
      $region47: #{en_conv_block_forward.4} parent=31 // pred_region
        _
      $region48: #{en_conv_block_forward.4} parent=31 // pred_fallthru
        _
      // Predicated region
      $region49: #{en_conv_block_forward.4} parent=31 // pred_check
        %p1067 = pneg %p124
      $region50: #{en_conv_block_forward.4} parent=31 // pred_check_branch
        %1069 = sbr.rel (%p1067) target = $region52
      $region51: #{en_conv_block_forward.4} parent=31 // pred_region
        _
      $region52: #{en_conv_block_forward.4} parent=31 // pred_fallthru
        _
      // Predicated region
      $region53: #{en_conv_block_forward.4} parent=31 // pred_check
        %p1070 = pneg %p145
      $region54: #{en_conv_block_forward.4} parent=31 // pred_check_branch
        %1072 = sbr.rel (%p1070) target = $region56
      $region55: #{en_conv_block_forward.4} parent=31 // pred_region
        _
      $region56: #{en_conv_block_forward.4} parent=31 // pred_fallthru
        _
    $region32: #{en_conv_block_forward.4} parent=5 // pred_fallthru
      _
    %p1073 = scmp.le.s32.totalorder 2, %s12
    // Predicated region
    $region57: #{en_conv_block_forward.4} parent=5 // pred_check
      %p1074 = pneg %p1073
    $region58: #{en_conv_block_forward.4} parent=5 // pred_check_branch
      %1076 = sbr.rel (%p1074) target = $region60
    $region59: #{en_conv_block_forward.4} parent=5 // pred_region
      %s1077 = ssub.s32 %s12, 2
      // Predicated region
      $region61: #{en_conv_block_forward.4} parent=59 // pred_check
        %p1078 = pneg %p109
      $region62: #{en_conv_block_forward.4} parent=59 // pred_check_branch
        %1080 = sbr.rel (%p1078) target = $region64
      $region63: #{en_conv_block_forward.4} parent=59 // pred_region
        %p1081 = scmp.lt.s32.totalorder %s18, 1
        %s1082 = scalar_select %p1081, %s18, 1
        %s1083 = smul.addr %s1082, 3
        %s1084 = smul.addr %s1083, 8
        %s1085 = scalar_lea.vmem %s3, %s1084
      $region64: #{en_conv_block_forward.4} parent=59 // pred_fallthru
        _
    $region60: #{en_conv_block_forward.4} parent=5 // pred_fallthru
      _
  $region6: #{en_conv_block_forward.4} parent=0 // loop_footer
    %s16 = sadd.s32 1, %s12
  $region7: #{en_conv_block_forward.4} parent=0 // loop_footer_branch
    %11 = sbr.rel target = $region3
  $region8: #{en_conv_block_forward.4} parent=0 // loop_exit
    _

// kernel: en_conv_block_forward.6
$region0: #{en_conv_block_forward.6}
  #allocation0 [shape = 'u32[]', space=smem, size = 0x4, offset = 0x4, fixed_abs, tag = 'smem constant byte address 0x4 - core index']
  #allocation1 [shape = 'u32[72,128]{1,0:T(1,128)}', space=vmem, size = 0x9000, scoped, tag = 'internal scratch']
  %s0 = inlined_call_operand.vmem [shape: f32[2,8,324], index: 0, kind: input, shape index: {}]
  %s1 = inlined_call_operand.vmem [shape: f32[9,8,8], index: 1, kind: input, shape index: {}]
  %s2 = inlined_call_operand.vmem [shape: f32[1,286], index: 2, kind: input, shape index: {}]
  %s3 = inlined_call_operand.vmem [shape: f32[2,8,286], index: 3, kind: output, shape index: {0}]
  %s4 = inlined_call_operand.vmem [shape: f32[8,1], index: 4, kind: output, shape index: {1}]
  %s5 = inlined_call_operand.vmem [shape: f32[8,1], index: 5, kind: output, shape index: {2}]
  %6 = xla_tuple %s3, %s4, %s5
  %s7 = sld [smem:[#allocation0]]
  $region65: #{en_conv_block_forward.6} parent=0
    _
  %s9 = ssub.s32 1, %s7
  %s10 = scalar_select 0, %s9, %s7
  loop: start=0, step=1, limit=4
  $region2: #{en_conv_block_forward.6} parent=0 // loop_pre_header
    _
  $region3: #{en_conv_block_forward.6} parent=0 // loop_header
    %s12 = sphi 0, %s16
    %p13 = scmp.ge.s32.totalorder %s12, 4
    %s22 = sphi 0, %s24
    %s25 = sphi 0, %s22
    %s26 = sphi 0, %s25
    %s42 = sphi 0, %s26
    %s46 = sphi 0, %s46
    %s48 = sphi 0, %s46
    %s49 = sphi 0, %s48
    %s63 = sphi 0, %s49
    %s67 = sphi 0, %s67
    %s69 = sphi 0, %s67
    %s70 = sphi 0, %s69
    %s84 = sphi 0, %s70
    %s90 = sphi 0, %s92
    %s93 = sphi 0, %s90
    %s94 = sphi 0, %s93
    %s110 = sphi 0, %s94
    %s114 = sphi 0, %s114
    %s116 = sphi 0, %s114
    %s117 = sphi 0, %s116
    %s131 = sphi 0, %s117
    %s135 = sphi 0, %s135
    %s137 = sphi 0, %s135
    %s138 = sphi 0, %s137
    %s152 = sphi 0, %s138
  $region4: #{en_conv_block_forward.6} parent=0 // loop_header_branch
    %15 = sbr.rel (%p13) target = $region8
  $region5: #{en_conv_block_forward.6} parent=0 // loop_body
    %s17 = ssub.s32 %s12, 1
    %s18 = ssub.s32 %s12, 2
    %s19 = sadd.s32 %s12, 1
    %s20 = ssub.s32 %s12, %s19
    %p21 = scmp.eq.s32.totalorder %s20, 0
    %s23 = sadd.s32 %s22, 1
    %s24 = scalar_select %p21, %s22, %s23
    %p27 = pneg %p21
    %p28 = scmp.eq.s32.totalorder %s12, 1
    %p29 = por %p27, %p28
    %p30 = scmp.ne.s32.totalorder %s22, %s25
    %p31 = scmp.eq.s32.totalorder %s12, 0
    %p32 = por %p30, %p31
    %p33 = scmp.ne.s32.totalorder %s22, %s25
    %p34 = scmp.eq.s32.totalorder %s17, 1
    %p35 = por %p33, %p34
    %p36 = scmp.ne.s32.totalorder %s25, %s26
    %p37 = scmp.eq.s32.totalorder %s17, 0
    %p38 = por %p36, %p37
    %p39 = scmp.ne.s32.totalorder %s25, %s26
    %p40 = scmp.eq.s32.totalorder %s18, 1
    %p41 = por %p39, %p40
    %p43 = scmp.ne.s32.totalorder %s26, %s42
    %p44 = scmp.eq.s32.totalorder %s18, 0
    %p45 = por %p43, %p44
    %s47 = sadd.s32 %s46, 1
    %p50 = scmp.eq.s32.totalorder %s12, 1
    %p51 = scmp.ne.s32.totalorder %s46, %s48
    %p52 = scmp.eq.s32.totalorder %s12, 0
    %p53 = por %p51, %p52
    %p54 = scmp.ne.s32.totalorder %s46, %s48
    %p55 = scmp.eq.s32.totalorder %s17, 1
    %p56 = por %p54, %p55
    %p57 = scmp.ne.s32.totalorder %s48, %s49
    %p58 = scmp.eq.s32.totalorder %s17, 0
    %p59 = por %p57, %p58
    %p60 = scmp.ne.s32.totalorder %s48, %s49
    %p61 = scmp.eq.s32.totalorder %s18, 1
    %p62 = por %p60, %p61
    %p64 = scmp.ne.s32.totalorder %s49, %s63
    %p65 = scmp.eq.s32.totalorder %s18, 0
    %p66 = por %p64, %p65
    %s68 = sadd.s32 %s67, 1
    %p71 = scmp.eq.s32.totalorder %s12, 1
    %p72 = scmp.ne.s32.totalorder %s67, %s69
    %p73 = scmp.eq.s32.totalorder %s12, 0
    %p74 = por %p72, %p73
    %p75 = scmp.ne.s32.totalorder %s67, %s69
    %p76 = scmp.eq.s32.totalorder %s17, 1
    %p77 = por %p75, %p76
    %p78 = scmp.ne.s32.totalorder %s69, %s70
    %p79 = scmp.eq.s32.totalorder %s17, 0
    %p80 = por %p78, %p79
    %p81 = scmp.ne.s32.totalorder %s69, %s70
    %p82 = scmp.eq.s32.totalorder %s18, 1
    %p83 = por %p81, %p82
    %p85 = scmp.ne.s32.totalorder %s70, %s84
    %p86 = scmp.eq.s32.totalorder %s18, 0
    %p87 = por %p85, %p86
    %s88 = ssub.s32 %s12, %s19
    %p89 = scmp.eq.s32.totalorder %s88, 0
    %s91 = sadd.s32 %s90, 1
    %s92 = scalar_select %p89, %s90, %s91
    %p95 = pneg %p89
    %p96 = scmp.eq.s32.totalorder %s12, 1
    %p97 = por %p95, %p96
    %p98 = scmp.ne.s32.totalorder %s90, %s93
    %p99 = scmp.eq.s32.totalorder %s12, 0
    %p100 = por %p98, %p99
    %p101 = scmp.ne.s32.totalorder %s90, %s93
    %p102 = scmp.eq.s32.totalorder %s17, 1
    %p103 = por %p101, %p102
    %p104 = scmp.ne.s32.totalorder %s93, %s94
    %p105 = scmp.eq.s32.totalorder %s17, 0
    %p106 = por %p104, %p105
    %p107 = scmp.ne.s32.totalorder %s93, %s94
    %p108 = scmp.eq.s32.totalorder %s18, 1
    %p109 = por %p107, %p108
    %p111 = scmp.ne.s32.totalorder %s94, %s110
    %p112 = scmp.eq.s32.totalorder %s18, 0
    %p113 = por %p111, %p112
    %s115 = sadd.s32 %s114, 1
    %p118 = scmp.eq.s32.totalorder %s12, 1
    %p119 = scmp.ne.s32.totalorder %s114, %s116
    %p120 = scmp.eq.s32.totalorder %s12, 0
    %p121 = por %p119, %p120
    %p122 = scmp.ne.s32.totalorder %s114, %s116
    %p123 = scmp.eq.s32.totalorder %s17, 1
    %p124 = por %p122, %p123
    %p125 = scmp.ne.s32.totalorder %s116, %s117
    %p126 = scmp.eq.s32.totalorder %s17, 0
    %p127 = por %p125, %p126
    %p128 = scmp.ne.s32.totalorder %s116, %s117
    %p129 = scmp.eq.s32.totalorder %s18, 1
    %p130 = por %p128, %p129
    %p132 = scmp.ne.s32.totalorder %s117, %s131
    %p133 = scmp.eq.s32.totalorder %s18, 0
    %p134 = por %p132, %p133
    %s136 = sadd.s32 %s135, 1
    %p139 = scmp.eq.s32.totalorder %s12, 1
    %p140 = scmp.ne.s32.totalorder %s135, %s137
    %p141 = scmp.eq.s32.totalorder %s12, 0
    %p142 = por %p140, %p141
    %p143 = scmp.ne.s32.totalorder %s135, %s137
    %p144 = scmp.eq.s32.totalorder %s17, 1
    %p145 = por %p143, %p144
    %p146 = scmp.ne.s32.totalorder %s137, %s138
    %p147 = scmp.eq.s32.totalorder %s17, 0
    %p148 = por %p146, %p147
    %p149 = scmp.ne.s32.totalorder %s137, %s138
    %p150 = scmp.eq.s32.totalorder %s18, 1
    %p151 = por %p149, %p150
    %p153 = scmp.ne.s32.totalorder %s138, %s152
    %p154 = scmp.eq.s32.totalorder %s18, 0
    %p155 = por %p153, %p154
    %p156 = scmp.le.s32.totalorder 1, %s12
    %p157 = scmp.lt.s32.totalorder %s12, 3
    %p158 = pnand %p156, %p157
    %p159 = pneg %p158
    // Predicated region
    $region9: #{en_conv_block_forward.6} parent=5 // pred_check
      _
    $region10: #{en_conv_block_forward.6} parent=5 // pred_check_branch
      %161 = sbr.rel (%p158) target = $region12
    $region11: #{en_conv_block_forward.6} parent=5 // pred_region
      %s162 = ssub.s32 %s12, 1
      // Predicated region
      $region13: #{en_conv_block_forward.6} parent=11 // pred_check
        %p163 = pneg %p59
      $region14: #{en_conv_block_forward.6} parent=11 // pred_check_branch
        %165 = sbr.rel (%p163) target = $region16
      $region15: #{en_conv_block_forward.6} parent=11 // pred_region
        _
      $region16: #{en_conv_block_forward.6} parent=11 // pred_fallthru
        _
      // Predicated region
      $region17: #{en_conv_block_forward.6} parent=11 // pred_check
        %p166 = pneg %p80
      $region18: #{en_conv_block_forward.6} parent=11 // pred_check_branch
        %168 = sbr.rel (%p166) target = $region20
      $region19: #{en_conv_block_forward.6} parent=11 // pred_region
        _
      $region20: #{en_conv_block_forward.6} parent=11 // pred_fallthru
        _
    $region12: #{en_conv_block_forward.6} parent=5 // pred_fallthru
      _
    %p169 = scmp.lt.s32.totalorder %s12, 2
    // Predicated region
    $region21: #{en_conv_block_forward.6} parent=5 // pred_check
      %p170 = pneg %p169
    $region22: #{en_conv_block_forward.6} parent=5 // pred_check_branch
      %172 = sbr.rel (%p170) target = $region24
    $region23: #{en_conv_block_forward.6} parent=5 // pred_region
      // Predicated region
      $region25: #{en_conv_block_forward.6} parent=23 // pred_check
        %p173 = pneg %p32
      $region26: #{en_conv_block_forward.6} parent=23 // pred_check_branch
        %175 = sbr.rel (%p173) target = $region28
      $region27: #{en_conv_block_forward.6} parent=23 // pred_region
        %p176 = scmp.lt.s32.totalorder %s12, 1
        %s177 = scalar_select %p176, %s12, 1
        %s178 = smul.addr %s177, 3
        %s179 = smul.addr %s178, 8
        %s180 = scalar_lea.vmem %s0, %s179
      $region28: #{en_conv_block_forward.6} parent=23 // pred_fallthru
        _
    $region24: #{en_conv_block_forward.6} parent=5 // pred_fallthru
      _
    %p181 = scmp.le.s32.totalorder 1, %s12
    %p182 = scmp.lt.s32.totalorder %s12, 3
    %p183 = pnand %p181, %p182
    %p184 = pneg %p183
    // Predicated region
    $region29: #{en_conv_block_forward.6} parent=5 // pred_check
      _
    $region30: #{en_conv_block_forward.6} parent=5 // pred_check_branch
      %186 = sbr.rel (%p183) target = $region32
    $region31: #{en_conv_block_forward.6} parent=5 // pred_region
      %s187 = ssub.s32 %s12, 1
      %p188 = scmp.lt.s32.totalorder %s17, 1
      %s189 = scalar_select %p188, %s17, 1
      %s190 = smul.addr %s189, 3
      %s191 = smul.addr %s190, 8
      %s192 = scalar_lea.vmem %s0, %s191
      %p193 = pneg %p38
      %p194 = pneg %p35
      %p195 = pneg %p59
      %p196 = pneg %p56
      %p197 = pneg %p80
      %p198 = pneg %p77
      %p199 = pneg %p106
      %p200 = pneg %p103
      %p201 = scmp.lt.s32.totalorder %s17, 1
      %s202 = scalar_select %p201, %s17, 1
      %s203 = smul.addr %s202, 3
      %s204 = smul.addr %s203, 8
      %s205 = scalar_lea.vmem %s3, %s204
      %p206 = pneg %p127
      %p207 = pneg %p124
      %p208 = pneg %p148
      %p209 = pneg %p145
      %p210 = scmp.lt.s32.totalorder %s17, 1
      %s211 = scalar_select %p210, %s17, 1
      %s212 = smul.addr %s211, 3
      %s213 = smul.addr %s212, 8
      %s214 = scalar_lea.vmem %s0, %s213
      %p215 = scmp.lt.s32.totalorder %s17, 1
      %s216 = scalar_select %p215, %s17, 1
      %s217 = smul.addr %s216, 3
      %s218 = smul.addr %s217, 8
      %s219 = scalar_lea.vmem %s3, %s218
      %p220 = scmp.eq.s32.totalorder %s17, 0
      // Predicated region
      $region33: #{en_conv_block_forward.6} parent=31 // pred_check
        %p221 = pneg %p220
      $region34: #{en_conv_block_forward.6} parent=31 // pred_check_branch
        %223 = sbr.rel (%p221) target = $region36
      $region35: #{en_conv_block_forward.6} parent=31 // pred_region
        %vm224 = vcmask 7168
        %225 = vst.msk [vmem:[%s4] sm:$0xff] %vm224, 0.0
        %226 = vst.msk [vmem:[%s5] sm:$0xff] %vm224, 0.0
      $region36: #{en_conv_block_forward.6} parent=31 // pred_fallthru
        _
      %v227 = vld [vmem:[%s214] sm:$0xff]
      %v228 = vld [vmem:[%s214 + $0x8] sm:$0xff]
      %v229 = vld [vmem:[%s214 + $0x10] sm:$0xff]
      %v230 = vld [vmem:[%s1] sm:$0xff]
      %s231 = scalar_lea.vmem %s1, 8
      %v232 = vld [vmem:[%s231] sm:$0xff]
      %236 = vrot.lane.b32.xlu0 %v227, 127
      %v237 = vpop.permute.xlu0 %236
      %238 = vrot.lane.b32.xlu0 %v228, 127
      %v239 = vpop.permute.xlu0 %238
      %240 = vrot.lane.b32.xlu0 %v229, 127
      %v241 = vpop.permute.xlu0 %240
      %vm242 = vcmask 1039360
      %v243 = vsel %vm242, %v237, %v239
      %v244 = vsel %vm242, %v239, %v241
      %vm248 = vcmask 64512
      %v250 = vsel %vm248, %v232, 0
      %252 = vmatpush.msra.mxu0 0.0
      %253 = vmatpush.msra.mxu0 0.0
      %254 = vmatpush.msra.mxu0 0.0
      %255 = vmatpush.msra.mxu0 0.0
      %256 = vmatpush.msra.mxu0 0.0
      %257 = vmatpush.msra.mxu0 0.0
      %258 = vmatpush.msra.mxu0 0.0
      %259 = vmatpush.msra.mxu0 0.0
      %260 = vmatpush.msra.mxu0 0.0
      %261 = vmatpush.msra.mxu0 0.0
      %262 = vmatpush.msra.mxu0 0.0
      %263 = vmatpush.msra.mxu0 0.0
      %264 = vmatpush.msra.mxu0 0.0
      %265 = vmatpush.msra.mxu0 0.0
      %266 = vmatpush.msra.mxu0 0.0
      %267 = vmatpush.msra.mxu0 %v243
      %268 = vmatmul.f32.gmra.mxu0 %v250
      %v269 = vpop.f32.mrf.mxu0
      %v270 = vadd.f32 0.0, %v269
      %271 = vdwg.mxu0
      %272 = vmatpush.msra.mxu0 0.0
      %273 = vmatpush.msra.mxu0 0.0
      %274 = vmatpush.msra.mxu0 0.0
      %275 = vmatpush.msra.mxu0 0.0
      %276 = vmatpush.msra.mxu0 0.0
      %277 = vmatpush.msra.mxu0 0.0
      %278 = vmatpush.msra.mxu0 0.0
      %279 = vmatpush.msra.mxu0 0.0
      %280 = vmatpush.msra.mxu0 0.0
      %281 = vmatpush.msra.mxu0 0.0
      %282 = vmatpush.msra.mxu0 0.0
      %283 = vmatpush.msra.mxu0 0.0
      %284 = vmatpush.msra.mxu0 0.0
      %285 = vmatpush.msra.mxu0 0.0
      %286 = vmatpush.msra.mxu0 0.0
      %287 = vmatpush.msra.mxu0 %v244
      %288 = vmatmul.f32.gmra.mxu0 %v250
      %v289 = vpop.f32.mrf.mxu0
      %v290 = vadd.f32 0.0, %v289
      %291 = vdwg.mxu0
      %292 = vmatpush.msra.mxu0 0.0
      %293 = vmatpush.msra.mxu0 0.0
      %294 = vmatpush.msra.mxu0 0.0
      %295 = vmatpush.msra.mxu0 0.0
      %296 = vmatpush.msra.mxu0 0.0
      %297 = vmatpush.msra.mxu0 0.0
      %298 = vmatpush.msra.mxu0 0.0
      %299 = vmatpush.msra.mxu0 0.0
      %300 = vmatpush.msra.mxu0 0.0
      %301 = vmatpush.msra.mxu0 0.0
      %302 = vmatpush.msra.mxu0 0.0
      %303 = vmatpush.msra.mxu0 0.0
      %304 = vmatpush.msra.mxu0 0.0
      %305 = vmatpush.msra.mxu0 0.0
      %306 = vmatpush.msra.mxu0 0.0
      %307 = vmatpush.msra.mxu0 %v241
      %308 = vmatmul.f32.gmra.mxu0 %v250
      %v309 = vpop.f32.mrf.mxu0
      %v310 = vadd.f32 0.0, %v309
      %311 = vdwg.mxu0
      %v313 = vsel %vm248, %v230, 0
      %315 = vmatpush.msra.mxu0 0.0
      %316 = vmatpush.msra.mxu0 0.0
      %317 = vmatpush.msra.mxu0 0.0
      %318 = vmatpush.msra.mxu0 0.0
      %319 = vmatpush.msra.mxu0 0.0
      %320 = vmatpush.msra.mxu0 0.0
      %321 = vmatpush.msra.mxu0 0.0
      %322 = vmatpush.msra.mxu0 0.0
      %323 = vmatpush.msra.mxu0 0.0
      %324 = vmatpush.msra.mxu0 0.0
      %325 = vmatpush.msra.mxu0 0.0
      %326 = vmatpush.msra.mxu0 0.0
      %327 = vmatpush.msra.mxu0 0.0
      %328 = vmatpush.msra.mxu0 0.0
      %329 = vmatpush.msra.mxu0 0.0
      %330 = vmatpush.msra.mxu0 %v227
      %331 = vmatmul.f32.gmra.mxu0 %v313
      %v332 = vpop.f32.mrf.mxu0
      %v333 = vadd.f32 %v270, %v332
      %334 = vdwg.mxu0
      %335 = vmatpush.msra.mxu0 0.0
      %336 = vmatpush.msra.mxu0 0.0
      %337 = vmatpush.msra.mxu0 0.0
      %338 = vmatpush.msra.mxu0 0.0
      %339 = vmatpush.msra.mxu0 0.0
      %340 = vmatpush.msra.mxu0 0.0
      %341 = vmatpush.msra.mxu0 0.0
      %342 = vmatpush.msra.mxu0 0.0
      %343 = vmatpush.msra.mxu0 0.0
      %344 = vmatpush.msra.mxu0 0.0
      %345 = vmatpush.msra.mxu0 0.0
      %346 = vmatpush.msra.mxu0 0.0
      %347 = vmatpush.msra.mxu0 0.0
      %348 = vmatpush.msra.mxu0 0.0
      %349 = vmatpush.msra.mxu0 0.0
      %350 = vmatpush.msra.mxu0 %v228
      %351 = vmatmul.f32.gmra.mxu0 %v313
      %v352 = vpop.f32.mrf.mxu0
      %v353 = vadd.f32 %v290, %v352
      %354 = vdwg.mxu0
      %355 = vmatpush.msra.mxu0 0.0
      %356 = vmatpush.msra.mxu0 0.0
      %357 = vmatpush.msra.mxu0 0.0
      %358 = vmatpush.msra.mxu0 0.0
      %359 = vmatpush.msra.mxu0 0.0
      %360 = vmatpush.msra.mxu0 0.0
      %361 = vmatpush.msra.mxu0 0.0
      %362 = vmatpush.msra.mxu0 0.0
      %363 = vmatpush.msra.mxu0 0.0
      %364 = vmatpush.msra.mxu0 0.0
      %365 = vmatpush.msra.mxu0 0.0
      %366 = vmatpush.msra.mxu0 0.0
      %367 = vmatpush.msra.mxu0 0.0
      %368 = vmatpush.msra.mxu0 0.0
      %369 = vmatpush.msra.mxu0 0.0
      %370 = vmatpush.msra.mxu0 %v229
      %371 = vmatmul.f32.gmra.mxu0 %v313
      %v372 = vpop.f32.mrf.mxu0
      %v373 = vadd.f32 %v310, %v372
      %374 = vdwg.mxu0
      %s375 = scalar_lea.vmem %s1, 16
      %v376 = vld [vmem:[%s375] sm:$0xff]
      %377 = vrot.lane.b32.xlu0 %v227, 126
      %v378 = vpop.permute.xlu0 %377
      %379 = vrot.lane.b32.xlu0 %v228, 126
      %v380 = vpop.permute.xlu0 %379
      %381 = vrot.lane.b32.xlu0 %v229, 126
      %v382 = vpop.permute.xlu0 %381
      %vm383 = vcmask 1031168
      %v384 = vsel %vm383, %v378, %v380
      %v385 = vsel %vm383, %v380, %v382
      %v390 = vsel %vm248, %v376, 0
      %392 = vmatpush.msra.mxu0 0.0
      %393 = vmatpush.msra.mxu0 0.0
      %394 = vmatpush.msra.mxu0 0.0
      %395 = vmatpush.msra.mxu0 0.0
      %396 = vmatpush.msra.mxu0 0.0
      %397 = vmatpush.msra.mxu0 0.0
      %398 = vmatpush.msra.mxu0 0.0
      %399 = vmatpush.msra.mxu0 0.0
      %400 = vmatpush.msra.mxu0 0.0
      %401 = vmatpush.msra.mxu0 0.0
      %402 = vmatpush.msra.mxu0 0.0
      %403 = vmatpush.msra.mxu0 0.0
      %404 = vmatpush.msra.mxu0 0.0
      %405 = vmatpush.msra.mxu0 0.0
      %406 = vmatpush.msra.mxu0 0.0
      %407 = vmatpush.msra.mxu0 %v384
      %408 = vmatmul.f32.gmra.mxu0 %v390
      %v409 = vpop.f32.mrf.mxu0
      %v410 = vadd.f32 0.0, %v409
      %411 = vdwg.mxu0
      %412 = vmatpush.msra.mxu0 0.0
      %413 = vmatpush.msra.mxu0 0.0
      %414 = vmatpush.msra.mxu0 0.0
      %415 = vmatpush.msra.mxu0 0.0
      %416 = vmatpush.msra.mxu0 0.0
      %417 = vmatpush.msra.mxu0 0.0
      %418 = vmatpush.msra.mxu0 0.0
      %419 = vmatpush.msra.mxu0 0.0
      %420 = vmatpush.msra.mxu0 0.0
      %421 = vmatpush.msra.mxu0 0.0
      %422 = vmatpush.msra.mxu0 0.0
      %423 = vmatpush.msra.mxu0 0.0
      %424 = vmatpush.msra.mxu0 0.0
      %425 = vmatpush.msra.mxu0 0.0
      %426 = vmatpush.msra.mxu0 0.0
      %427 = vmatpush.msra.mxu0 %v385
      %428 = vmatmul.f32.gmra.mxu0 %v390
      %v429 = vpop.f32.mrf.mxu0
      %v430 = vadd.f32 0.0, %v429
      %431 = vdwg.mxu0
      %432 = vmatpush.msra.mxu0 0.0
      %433 = vmatpush.msra.mxu0 0.0
      %434 = vmatpush.msra.mxu0 0.0
      %435 = vmatpush.msra.mxu0 0.0
      %436 = vmatpush.msra.mxu0 0.0
      %437 = vmatpush.msra.mxu0 0.0
      %438 = vmatpush.msra.mxu0 0.0
      %439 = vmatpush.msra.mxu0 0.0
      %440 = vmatpush.msra.mxu0 0.0
      %441 = vmatpush.msra.mxu0 0.0
      %442 = vmatpush.msra.mxu0 0.0
      %443 = vmatpush.msra.mxu0 0.0
      %444 = vmatpush.msra.mxu0 0.0
      %445 = vmatpush.msra.mxu0 0.0
      %446 = vmatpush.msra.mxu0 0.0
      %447 = vmatpush.msra.mxu0 %v382
      %448 = vmatmul.f32.gmra.mxu0 %v390
      %v449 = vpop.f32.mrf.mxu0
      %v450 = vadd.f32 0.0, %v449
      %451 = vdwg.mxu0
      %v452 = vadd.f32 %v333, %v410
      %v453 = vadd.f32 %v353, %v430
      %v454 = vadd.f32 %v373, %v450
      %s455 = scalar_lea.vmem %s1, 24
      %v456 = vld [vmem:[%s455] sm:$0xff]
      %457 = vrot.lane.b32.xlu0 %v227, 110
      %v458 = vpop.permute.xlu0 %457
      %459 = vrot.lane.b32.xlu0 %v228, 110
      %v460 = vpop.permute.xlu0 %459
      %461 = vrot.lane.b32.xlu0 %v229, 110
      %v462 = vpop.permute.xlu0 %461
      %vm463 = vcmask 900096
      %v464 = vsel %vm463, %v458, %v460
      %v465 = vsel %vm463, %v460, %v462
      %v470 = vsel %vm248, %v456, 0
      %472 = vmatpush.msra.mxu0 0.0
      %473 = vmatpush.msra.mxu0 0.0
      %474 = vmatpush.msra.mxu0 0.0
      %475 = vmatpush.msra.mxu0 0.0
      %476 = vmatpush.msra.mxu0 0.0
      %477 = vmatpush.msra.mxu0 0.0
      %478 = vmatpush.msra.mxu0 0.0
      %479 = vmatpush.msra.mxu0 0.0
      %480 = vmatpush.msra.mxu0 0.0
      %481 = vmatpush.msra.mxu0 0.0
      %482 = vmatpush.msra.mxu0 0.0
      %483 = vmatpush.msra.mxu0 0.0
      %484 = vmatpush.msra.mxu0 0.0
      %485 = vmatpush.msra.mxu0 0.0
      %486 = vmatpush.msra.mxu0 0.0
      %487 = vmatpush.msra.mxu0 %v464
      %488 = vmatmul.f32.gmra.mxu0 %v470
      %v489 = vpop.f32.mrf.mxu0
      %v490 = vadd.f32 0.0, %v489
      %491 = vdwg.mxu0
      %492 = vmatpush.msra.mxu0 0.0
      %493 = vmatpush.msra.mxu0 0.0
      %494 = vmatpush.msra.mxu0 0.0
      %495 = vmatpush.msra.mxu0 0.0
      %496 = vmatpush.msra.mxu0 0.0
      %497 = vmatpush.msra.mxu0 0.0
      %498 = vmatpush.msra.mxu0 0.0
      %499 = vmatpush.msra.mxu0 0.0
      %500 = vmatpush.msra.mxu0 0.0
      %501 = vmatpush.msra.mxu0 0.0
      %502 = vmatpush.msra.mxu0 0.0
      %503 = vmatpush.msra.mxu0 0.0
      %504 = vmatpush.msra.mxu0 0.0
      %505 = vmatpush.msra.mxu0 0.0
      %506 = vmatpush.msra.mxu0 0.0
      %507 = vmatpush.msra.mxu0 %v465
      %508 = vmatmul.f32.gmra.mxu0 %v470
      %v509 = vpop.f32.mrf.mxu0
      %v510 = vadd.f32 0.0, %v509
      %511 = vdwg.mxu0
      %512 = vmatpush.msra.mxu0 0.0
      %513 = vmatpush.msra.mxu0 0.0
      %514 = vmatpush.msra.mxu0 0.0
      %515 = vmatpush.msra.mxu0 0.0
      %516 = vmatpush.msra.mxu0 0.0
      %517 = vmatpush.msra.mxu0 0.0
      %518 = vmatpush.msra.mxu0 0.0
      %519 = vmatpush.msra.mxu0 0.0
      %520 = vmatpush.msra.mxu0 0.0
      %521 = vmatpush.msra.mxu0 0.0
      %522 = vmatpush.msra.mxu0 0.0
      %523 = vmatpush.msra.mxu0 0.0
      %524 = vmatpush.msra.mxu0 0.0
      %525 = vmatpush.msra.mxu0 0.0
      %526 = vmatpush.msra.mxu0 0.0
      %527 = vmatpush.msra.mxu0 %v462
      %528 = vmatmul.f32.gmra.mxu0 %v470
      %v529 = vpop.f32.mrf.mxu0
      %v530 = vadd.f32 0.0, %v529
      %531 = vdwg.mxu0
      %v532 = vadd.f32 %v452, %v490
      %v533 = vadd.f32 %v453, %v510
      %v534 = vadd.f32 %v454, %v530
      %s535 = scalar_lea.vmem %s1, 32
      %v536 = vld [vmem:[%s535] sm:$0xff]
      %537 = vrot.lane.b32.xlu0 %v227, 109
      %v538 = vpop.permute.xlu0 %537
      %539 = vrot.lane.b32.xlu0 %v228, 109
      %v540 = vpop.permute.xlu0 %539
      %541 = vrot.lane.b32.xlu0 %v229, 109
      %v542 = vpop.permute.xlu0 %541
      %vm543 = vcmask 891904
      %v544 = vsel %vm543, %v538, %v540
      %v545 = vsel %vm543, %v540, %v542
      %v550 = vsel %vm248, %v536, 0
      %552 = vmatpush.msra.mxu0 0.0
      %553 = vmatpush.msra.mxu0 0.0
      %554 = vmatpush.msra.mxu0 0.0
      %555 = vmatpush.msra.mxu0 0.0
      %556 = vmatpush.msra.mxu0 0.0
      %557 = vmatpush.msra.mxu0 0.0
      %558 = vmatpush.msra.mxu0 0.0
      %559 = vmatpush.msra.mxu0 0.0
      %560 = vmatpush.msra.mxu0 0.0
      %561 = vmatpush.msra.mxu0 0.0
      %562 = vmatpush.msra.mxu0 0.0
      %563 = vmatpush.msra.mxu0 0.0
      %564 = vmatpush.msra.mxu0 0.0
      %565 = vmatpush.msra.mxu0 0.0
      %566 = vmatpush.msra.mxu0 0.0
      %567 = vmatpush.msra.mxu0 %v544
      %568 = vmatmul.f32.gmra.mxu0 %v550
      %v569 = vpop.f32.mrf.mxu0
      %v570 = vadd.f32 0.0, %v569
      %571 = vdwg.mxu0
      %572 = vmatpush.msra.mxu0 0.0
      %573 = vmatpush.msra.mxu0 0.0
      %574 = vmatpush.msra.mxu0 0.0
      %575 = vmatpush.msra.mxu0 0.0
      %576 = vmatpush.msra.mxu0 0.0
      %577 = vmatpush.msra.mxu0 0.0
      %578 = vmatpush.msra.mxu0 0.0
      %579 = vmatpush.msra.mxu0 0.0
      %580 = vmatpush.msra.mxu0 0.0
      %581 = vmatpush.msra.mxu0 0.0
      %582 = vmatpush.msra.mxu0 0.0
      %583 = vmatpush.msra.mxu0 0.0
      %584 = vmatpush.msra.mxu0 0.0
      %585 = vmatpush.msra.mxu0 0.0
      %586 = vmatpush.msra.mxu0 0.0
      %587 = vmatpush.msra.mxu0 %v545
      %588 = vmatmul.f32.gmra.mxu0 %v550
      %v589 = vpop.f32.mrf.mxu0
      %v590 = vadd.f32 0.0, %v589
      %591 = vdwg.mxu0
      %592 = vmatpush.msra.mxu0 0.0
      %593 = vmatpush.msra.mxu0 0.0
      %594 = vmatpush.msra.mxu0 0.0
      %595 = vmatpush.msra.mxu0 0.0
      %596 = vmatpush.msra.mxu0 0.0
      %597 = vmatpush.msra.mxu0 0.0
      %598 = vmatpush.msra.mxu0 0.0
      %599 = vmatpush.msra.mxu0 0.0
      %600 = vmatpush.msra.mxu0 0.0
      %601 = vmatpush.msra.mxu0 0.0
      %602 = vmatpush.msra.mxu0 0.0
      %603 = vmatpush.msra.mxu0 0.0
      %604 = vmatpush.msra.mxu0 0.0
      %605 = vmatpush.msra.mxu0 0.0
      %606 = vmatpush.msra.mxu0 0.0
      %607 = vmatpush.msra.mxu0 %v542
      %608 = vmatmul.f32.gmra.mxu0 %v550
      %v609 = vpop.f32.mrf.mxu0
      %v610 = vadd.f32 0.0, %v609
      %611 = vdwg.mxu0
      %v612 = vadd.f32 %v532, %v570
      %v613 = vadd.f32 %v533, %v590
      %v614 = vadd.f32 %v534, %v610
      %s615 = scalar_lea.vmem %s1, 40
      %v616 = vld [vmem:[%s615] sm:$0xff]
      %617 = vrot.lane.b32.xlu0 %v227, 108
      %v618 = vpop.permute.xlu0 %617
      %619 = vrot.lane.b32.xlu0 %v228, 108
      %v620 = vpop.permute.xlu0 %619
      %621 = vrot.lane.b32.xlu0 %v229, 108
      %v622 = vpop.permute.xlu0 %621
      %vm623 = vcmask 883712
      %v624 = vsel %vm623, %v618, %v620
      %v625 = vsel %vm623, %v620, %v622
      %v630 = vsel %vm248, %v616, 0
      %632 = vmatpush.msra.mxu0 0.0
      %633 = vmatpush.msra.mxu0 0.0
      %634 = vmatpush.msra.mxu0 0.0
      %635 = vmatpush.msra.mxu0 0.0
      %636 = vmatpush.msra.mxu0 0.0
      %637 = vmatpush.msra.mxu0 0.0
      %638 = vmatpush.msra.mxu0 0.0
      %639 = vmatpush.msra.mxu0 0.0
      %640 = vmatpush.msra.mxu0 0.0
      %641 = vmatpush.msra.mxu0 0.0
      %642 = vmatpush.msra.mxu0 0.0
      %643 = vmatpush.msra.mxu0 0.0
      %644 = vmatpush.msra.mxu0 0.0
      %645 = vmatpush.msra.mxu0 0.0
      %646 = vmatpush.msra.mxu0 0.0
      %647 = vmatpush.msra.mxu0 %v624
      %648 = vmatmul.f32.gmra.mxu0 %v630
      %v649 = vpop.f32.mrf.mxu0
      %v650 = vadd.f32 0.0, %v649
      %651 = vdwg.mxu0
      %652 = vmatpush.msra.mxu0 0.0
      %653 = vmatpush.msra.mxu0 0.0
      %654 = vmatpush.msra.mxu0 0.0
      %655 = vmatpush.msra.mxu0 0.0
      %656 = vmatpush.msra.mxu0 0.0
      %657 = vmatpush.msra.mxu0 0.0
      %658 = vmatpush.msra.mxu0 0.0
      %659 = vmatpush.msra.mxu0 0.0
      %660 = vmatpush.msra.mxu0 0.0
      %661 = vmatpush.msra.mxu0 0.0
      %662 = vmatpush.msra.mxu0 0.0
      %663 = vmatpush.msra.mxu0 0.0
      %664 = vmatpush.msra.mxu0 0.0
      %665 = vmatpush.msra.mxu0 0.0
      %666 = vmatpush.msra.mxu0 0.0
      %667 = vmatpush.msra.mxu0 %v625
      %668 = vmatmul.f32.gmra.mxu0 %v630
      %v669 = vpop.f32.mrf.mxu0
      %v670 = vadd.f32 0.0, %v669
      %671 = vdwg.mxu0
      %672 = vmatpush.msra.mxu0 0.0
      %673 = vmatpush.msra.mxu0 0.0
      %674 = vmatpush.msra.mxu0 0.0
      %675 = vmatpush.msra.mxu0 0.0
      %676 = vmatpush.msra.mxu0 0.0
      %677 = vmatpush.msra.mxu0 0.0
      %678 = vmatpush.msra.mxu0 0.0
      %679 = vmatpush.msra.mxu0 0.0
      %680 = vmatpush.msra.mxu0 0.0
      %681 = vmatpush.msra.mxu0 0.0
      %682 = vmatpush.msra.mxu0 0.0
      %683 = vmatpush.msra.mxu0 0.0
      %684 = vmatpush.msra.mxu0 0.0
      %685 = vmatpush.msra.mxu0 0.0
      %686 = vmatpush.msra.mxu0 0.0
      %687 = vmatpush.msra.mxu0 %v622
      %688 = vmatmul.f32.gmra.mxu0 %v630
      %v689 = vpop.f32.mrf.mxu0
      %v690 = vadd.f32 0.0, %v689
      %691 = vdwg.mxu0
      %v692 = vadd.f32 %v612, %v650
      %v693 = vadd.f32 %v613, %v670
      %v694 = vadd.f32 %v614, %v690
      %s695 = scalar_lea.vmem %s1, 48
      %v696 = vld [vmem:[%s695] sm:$0xff]
      %697 = vrot.lane.b32.xlu0 %v227, 92
      %v698 = vpop.permute.xlu0 %697
      %699 = vrot.lane.b32.xlu0 %v228, 92
      %v700 = vpop.permute.xlu0 %699
      %701 = vrot.lane.b32.xlu0 %v229, 92
      %v702 = vpop.permute.xlu0 %701
      %vm703 = vcmask 752640
      %v704 = vsel %vm703, %v698, %v700
      %v705 = vsel %vm703, %v700, %v702
      %v710 = vsel %vm248, %v696, 0
      %712 = vmatpush.msra.mxu0 0.0
      %713 = vmatpush.msra.mxu0 0.0
      %714 = vmatpush.msra.mxu0 0.0
      %715 = vmatpush.msra.mxu0 0.0
      %716 = vmatpush.msra.mxu0 0.0
      %717 = vmatpush.msra.mxu0 0.0
      %718 = vmatpush.msra.mxu0 0.0
      %719 = vmatpush.msra.mxu0 0.0
      %720 = vmatpush.msra.mxu0 0.0
      %721 = vmatpush.msra.mxu0 0.0
      %722 = vmatpush.msra.mxu0 0.0
      %723 = vmatpush.msra.mxu0 0.0
      %724 = vmatpush.msra.mxu0 0.0
      %725 = vmatpush.msra.mxu0 0.0
      %726 = vmatpush.msra.mxu0 0.0
      %727 = vmatpush.msra.mxu0 %v704
      %728 = vmatmul.f32.gmra.mxu0 %v710
      %v729 = vpop.f32.mrf.mxu0
      %v730 = vadd.f32 0.0, %v729
      %731 = vdwg.mxu0
      %732 = vmatpush.msra.mxu0 0.0
      %733 = vmatpush.msra.mxu0 0.0
      %734 = vmatpush.msra.mxu0 0.0
      %735 = vmatpush.msra.mxu0 0.0
      %736 = vmatpush.msra.mxu0 0.0
      %737 = vmatpush.msra.mxu0 0.0
      %738 = vmatpush.msra.mxu0 0.0
      %739 = vmatpush.msra.mxu0 0.0
      %740 = vmatpush.msra.mxu0 0.0
      %741 = vmatpush.msra.mxu0 0.0
      %742 = vmatpush.msra.mxu0 0.0
      %743 = vmatpush.msra.mxu0 0.0
      %744 = vmatpush.msra.mxu0 0.0
      %745 = vmatpush.msra.mxu0 0.0
      %746 = vmatpush.msra.mxu0 0.0
      %747 = vmatpush.msra.mxu0 %v705
      %748 = vmatmul.f32.gmra.mxu0 %v710
      %v749 = vpop.f32.mrf.mxu0
      %v750 = vadd.f32 0.0, %v749
      %751 = vdwg.mxu0
      %752 = vmatpush.msra.mxu0 0.0
      %753 = vmatpush.msra.mxu0 0.0
      %754 = vmatpush.msra.mxu0 0.0
      %755 = vmatpush.msra.mxu0 0.0
      %756 = vmatpush.msra.mxu0 0.0
      %757 = vmatpush.msra.mxu0 0.0
      %758 = vmatpush.msra.mxu0 0.0
      %759 = vmatpush.msra.mxu0 0.0
      %760 = vmatpush.msra.mxu0 0.0
      %761 = vmatpush.msra.mxu0 0.0
      %762 = vmatpush.msra.mxu0 0.0
      %763 = vmatpush.msra.mxu0 0.0
      %764 = vmatpush.msra.mxu0 0.0
      %765 = vmatpush.msra.mxu0 0.0
      %766 = vmatpush.msra.mxu0 0.0
      %767 = vmatpush.msra.mxu0 %v702
      %768 = vmatmul.f32.gmra.mxu0 %v710
      %v769 = vpop.f32.mrf.mxu0
      %v770 = vadd.f32 0.0, %v769
      %771 = vdwg.mxu0
      %v772 = vadd.f32 %v692, %v730
      %v773 = vadd.f32 %v693, %v750
      %v774 = vadd.f32 %v694, %v770
      %s775 = scalar_lea.vmem %s1, 56
      %v776 = vld [vmem:[%s775] sm:$0xff]
      %777 = vrot.lane.b32.xlu0 %v227, 91
      %v778 = vpop.permute.xlu0 %777
      %779 = vrot.lane.b32.xlu0 %v228, 91
      %v780 = vpop.permute.xlu0 %779
      %781 = vrot.lane.b32.xlu0 %v229, 91
      %v782 = vpop.permute.xlu0 %781
      %vm783 = vcmask 744448
      %v784 = vsel %vm783, %v778, %v780
      %v785 = vsel %vm783, %v780, %v782
      %v790 = vsel %vm248, %v776, 0
      %792 = vmatpush.msra.mxu0 0.0
      %793 = vmatpush.msra.mxu0 0.0
      %794 = vmatpush.msra.mxu0 0.0
      %795 = vmatpush.msra.mxu0 0.0
      %796 = vmatpush.msra.mxu0 0.0
      %797 = vmatpush.msra.mxu0 0.0
      %798 = vmatpush.msra.mxu0 0.0
      %799 = vmatpush.msra.mxu0 0.0
      %800 = vmatpush.msra.mxu0 0.0
      %801 = vmatpush.msra.mxu0 0.0
      %802 = vmatpush.msra.mxu0 0.0
      %803 = vmatpush.msra.mxu0 0.0
      %804 = vmatpush.msra.mxu0 0.0
      %805 = vmatpush.msra.mxu0 0.0
      %806 = vmatpush.msra.mxu0 0.0
      %807 = vmatpush.msra.mxu0 %v784
      %808 = vmatmul.f32.gmra.mxu0 %v790
      %v809 = vpop.f32.mrf.mxu0
      %v810 = vadd.f32 0.0, %v809
      %811 = vdwg.mxu0
      %812 = vmatpush.msra.mxu0 0.0
      %813 = vmatpush.msra.mxu0 0.0
      %814 = vmatpush.msra.mxu0 0.0
      %815 = vmatpush.msra.mxu0 0.0
      %816 = vmatpush.msra.mxu0 0.0
      %817 = vmatpush.msra.mxu0 0.0
      %818 = vmatpush.msra.mxu0 0.0
      %819 = vmatpush.msra.mxu0 0.0
      %820 = vmatpush.msra.mxu0 0.0
      %821 = vmatpush.msra.mxu0 0.0
      %822 = vmatpush.msra.mxu0 0.0
      %823 = vmatpush.msra.mxu0 0.0
      %824 = vmatpush.msra.mxu0 0.0
      %825 = vmatpush.msra.mxu0 0.0
      %826 = vmatpush.msra.mxu0 0.0
      %827 = vmatpush.msra.mxu0 %v785
      %828 = vmatmul.f32.gmra.mxu0 %v790
      %v829 = vpop.f32.mrf.mxu0
      %v830 = vadd.f32 0.0, %v829
      %831 = vdwg.mxu0
      %832 = vmatpush.msra.mxu0 0.0
      %833 = vmatpush.msra.mxu0 0.0
      %834 = vmatpush.msra.mxu0 0.0
      %835 = vmatpush.msra.mxu0 0.0
      %836 = vmatpush.msra.mxu0 0.0
      %837 = vmatpush.msra.mxu0 0.0
      %838 = vmatpush.msra.mxu0 0.0
      %839 = vmatpush.msra.mxu0 0.0
      %840 = vmatpush.msra.mxu0 0.0
      %841 = vmatpush.msra.mxu0 0.0
      %842 = vmatpush.msra.mxu0 0.0
      %843 = vmatpush.msra.mxu0 0.0
      %844 = vmatpush.msra.mxu0 0.0
      %845 = vmatpush.msra.mxu0 0.0
      %846 = vmatpush.msra.mxu0 0.0
      %847 = vmatpush.msra.mxu0 %v782
      %848 = vmatmul.f32.gmra.mxu0 %v790
      %v849 = vpop.f32.mrf.mxu0
      %v850 = vadd.f32 0.0, %v849
      %851 = vdwg.mxu0
      %v852 = vadd.f32 %v772, %v810
      %v853 = vadd.f32 %v773, %v830
      %v854 = vadd.f32 %v774, %v850
      %s855 = scalar_lea.vmem %s1, 64
      %v856 = vld [vmem:[%s855] sm:$0xff]
      %857 = vrot.lane.b32.xlu0 %v227, 90
      %v858 = vpop.permute.xlu0 %857
      %859 = vrot.lane.b32.xlu0 %v228, 90
      %v860 = vpop.permute.xlu0 %859
      %861 = vrot.lane.b32.xlu0 %v229, 90
      %v862 = vpop.permute.xlu0 %861
      %vm863 = vcmask 736256
      %v864 = vsel %vm863, %v858, %v860
      %v865 = vsel %vm863, %v860, %v862
      %v870 = vsel %vm248, %v856, 0
      %872 = vmatpush.msra.mxu0 0.0
      %873 = vmatpush.msra.mxu0 0.0
      %874 = vmatpush.msra.mxu0 0.0
      %875 = vmatpush.msra.mxu0 0.0
      %876 = vmatpush.msra.mxu0 0.0
      %877 = vmatpush.msra.mxu0 0.0
      %878 = vmatpush.msra.mxu0 0.0
      %879 = vmatpush.msra.mxu0 0.0
      %880 = vmatpush.msra.mxu0 0.0
      %881 = vmatpush.msra.mxu0 0.0
      %882 = vmatpush.msra.mxu0 0.0
      %883 = vmatpush.msra.mxu0 0.0
      %884 = vmatpush.msra.mxu0 0.0
      %885 = vmatpush.msra.mxu0 0.0
      %886 = vmatpush.msra.mxu0 0.0
      %887 = vmatpush.msra.mxu0 %v864
      %888 = vmatmul.f32.gmra.mxu0 %v870
      %v889 = vpop.f32.mrf.mxu0
      %v890 = vadd.f32 0.0, %v889
      %891 = vdwg.mxu0
      %892 = vmatpush.msra.mxu0 0.0
      %893 = vmatpush.msra.mxu0 0.0
      %894 = vmatpush.msra.mxu0 0.0
      %895 = vmatpush.msra.mxu0 0.0
      %896 = vmatpush.msra.mxu0 0.0
      %897 = vmatpush.msra.mxu0 0.0
      %898 = vmatpush.msra.mxu0 0.0
      %899 = vmatpush.msra.mxu0 0.0
      %900 = vmatpush.msra.mxu0 0.0
      %901 = vmatpush.msra.mxu0 0.0
      %902 = vmatpush.msra.mxu0 0.0
      %903 = vmatpush.msra.mxu0 0.0
      %904 = vmatpush.msra.mxu0 0.0
      %905 = vmatpush.msra.mxu0 0.0
      %906 = vmatpush.msra.mxu0 0.0
      %907 = vmatpush.msra.mxu0 %v865
      %908 = vmatmul.f32.gmra.mxu0 %v870
      %v909 = vpop.f32.mrf.mxu0
      %v910 = vadd.f32 0.0, %v909
      %911 = vdwg.mxu0
      %912 = vmatpush.msra.mxu0 0.0
      %913 = vmatpush.msra.mxu0 0.0
      %914 = vmatpush.msra.mxu0 0.0
      %915 = vmatpush.msra.mxu0 0.0
      %916 = vmatpush.msra.mxu0 0.0
      %917 = vmatpush.msra.mxu0 0.0
      %918 = vmatpush.msra.mxu0 0.0
      %919 = vmatpush.msra.mxu0 0.0
      %920 = vmatpush.msra.mxu0 0.0
      %921 = vmatpush.msra.mxu0 0.0
      %922 = vmatpush.msra.mxu0 0.0
      %923 = vmatpush.msra.mxu0 0.0
      %924 = vmatpush.msra.mxu0 0.0
      %925 = vmatpush.msra.mxu0 0.0
      %926 = vmatpush.msra.mxu0 0.0
      %927 = vmatpush.msra.mxu0 %v862
      %928 = vmatmul.f32.gmra.mxu0 %v870
      %v929 = vpop.f32.mrf.mxu0
      %v930 = vadd.f32 0.0, %v929
      %931 = vdwg.mxu0
      %v932 = vadd.f32 %v852, %v890
      %v933 = vadd.f32 %v853, %v910
      %v934 = vadd.f32 %v854, %v930
      %935 = vst [vmem:[%s219] sm:$0xff] %v932
      %936 = vst [vmem:[%s219 + $0x8] sm:$0xff] %v933
      %vm937 = vcmask 244736
      %938 = vst.msk [vmem:[%s219 + $0x10] sm:$0xff] %vm937, %v934
      %v939 = vld [vmem:[%s2] sm:$0x7]
      %v941 = vperm.slane %v939, 0
      %v942 = vperm.slane %v939, 1
      %v943 = vperm.slane %v939, 2
      %v947 = vmul.f32 %v932, %v941
      %v948 = vmul.f32 %v933, %v942
      %v949 = vmul.f32 %v934, %v943
      %v950 = vld [vmem:[%s4] sm:$0xff]
      %v951 = vadd.f32 %v947, %v948
      %v952 = vsel %vm937, %v949, 0.0
      %v953 = vadd.f32 %v951, %v952
      %954 = vadd.xlane.f32.xlu0 %v953
      %v955 = vpop.xlane.xlu0 %954
      %v956 = vadd.f32 %v950, %v955
      %vm957 = vcmask 7168
      %958 = vst.msk [vmem:[%s4] sm:$0xff] %vm957, %v956
      %v959 = vld [vmem:[%s5] sm:$0xff]
      %v960 = vmul.f32 %v947, %v947
      %v961 = vmul.f32 %v948, %v948
      %v962 = vmul.f32 %v949, %v949
      %v963 = vadd.f32 %v960, %v961
      %v964 = vsel %vm937, %v962, 0.0
      %v965 = vadd.f32 %v963, %v964
      %966 = vadd.xlane.f32.xlu0 %v965
      %v967 = vpop.xlane.xlu0 %966
      %v968 = vadd.f32 %v959, %v967
      %969 = vst.msk [vmem:[%s5] sm:$0xff] %vm957, %v968
      %p970 = scmp.lt.s32.totalorder %s17, 1
      %s971 = scalar_select %p970, %s17, 1
      %s972 = smul.addr %s971, 3
      %s973 = smul.addr %s972, 8
      %s974 = scalar_lea.vmem %s3, %s973
      // Predicated region
      $region37: #{en_conv_block_forward.6} parent=31 // pred_check
        %p975 = pneg %p103
      $region38: #{en_conv_block_forward.6} parent=31 // pred_check_branch
        %977 = sbr.rel (%p975) target = $region40
      $region39: #{en_conv_block_forward.6} parent=31 // pred_region
        _
      $region40: #{en_conv_block_forward.6} parent=31 // pred_fallthru
        _
      // Predicated region
      $region41: #{en_conv_block_forward.6} parent=31 // pred_check
        %p978 = pneg %p124
      $region42: #{en_conv_block_forward.6} parent=31 // pred_check_branch
        %980 = sbr.rel (%p978) target = $region44
      $region43: #{en_conv_block_forward.6} parent=31 // pred_region
        _
      $region44: #{en_conv_block_forward.6} parent=31 // pred_fallthru
        _
      // Predicated region
      $region45: #{en_conv_block_forward.6} parent=31 // pred_check
        %p981 = pneg %p145
      $region46: #{en_conv_block_forward.6} parent=31 // pred_check_branch
        %983 = sbr.rel (%p981) target = $region48
      $region47: #{en_conv_block_forward.6} parent=31 // pred_region
        _
      $region48: #{en_conv_block_forward.6} parent=31 // pred_fallthru
        _
      // Predicated region
      $region49: #{en_conv_block_forward.6} parent=31 // pred_check
        %p984 = pneg %p124
      $region50: #{en_conv_block_forward.6} parent=31 // pred_check_branch
        %986 = sbr.rel (%p984) target = $region52
      $region51: #{en_conv_block_forward.6} parent=31 // pred_region
        _
      $region52: #{en_conv_block_forward.6} parent=31 // pred_fallthru
        _
      // Predicated region
      $region53: #{en_conv_block_forward.6} parent=31 // pred_check
        %p987 = pneg %p145
      $region54: #{en_conv_block_forward.6} parent=31 // pred_check_branch
        %989 = sbr.rel (%p987) target = $region56
      $region55: #{en_conv_block_forward.6} parent=31 // pred_region
        _
      $region56: #{en_conv_block_forward.6} parent=31 // pred_fallthru
        _
    $region32: #{en_conv_block_forward.6} parent=5 // pred_fallthru
      _
    %p990 = scmp.le.s32.totalorder 2, %s12
    // Predicated region
    $region57: #{en_conv_block_forward.6} parent=5 // pred_check
      %p991 = pneg %p990
    $region58: #{en_conv_block_forward.6} parent=5 // pred_check_branch
      %993 = sbr.rel (%p991) target = $region60
    $region59: #{en_conv_block_forward.6} parent=5 // pred_region
      %s994 = ssub.s32 %s12, 2
      // Predicated region
      $region61: #{en_conv_block_forward.6} parent=59 // pred_check
        %p995 = pneg %p109
      $region62: #{en_conv_block_forward.6} parent=59 // pred_check_branch
        %997 = sbr.rel (%p995) target = $region64
      $region63: #{en_conv_block_forward.6} parent=59 // pred_region
        %p998 = scmp.lt.s32.totalorder %s18, 1
        %s999 = scalar_select %p998, %s18, 1
        %s1000 = smul.addr %s999, 3
        %s1001 = smul.addr %s1000, 8
        %s1002 = scalar_lea.vmem %s3, %s1001
      $region64: #{en_conv_block_forward.6} parent=59 // pred_fallthru
        _
    $region60: #{en_conv_block_forward.6} parent=5 // pred_fallthru
      _
  $region6: #{en_conv_block_forward.6} parent=0 // loop_footer
    %s16 = sadd.s32 1, %s12
  $region7: #{en_conv_block_forward.6} parent=0 // loop_footer_branch
    %11 = sbr.rel target = $region3
  $region8: #{en_conv_block_forward.6} parent=0 // loop_exit
    _

</llo_original>
